<compile_context>
chip_gen: v5e
topology: v5e:2x2
jax: 0.10.0
libtpu: 0.0.40
codegen_flags: <defaults>
</compile_context>

<pallas_src>
import jax
import jax.numpy as jnp
from jax.experimental import pallas as pl
from jax.experimental.pallas import tpu as pltpu

HALO = 8  # halo rows on each side of the padded activation scratches


def _spectral_cnn_kernel(x_ref, w1_ref, b1_ref, w2_ref, b2_ref, w3_ref, b3_ref,
                         wf1_ref, bf1_ref, wf2_ref, bf2_ref, o_ref,
                         p1_ref, p2_ref, p3_ref):
    """Fused forward for one batch tile (everything resident in VMEM).

    x_ref:   (TN, L)        input tile, length on lanes
    w1_ref:  (K1, C1)       conv1 weights (Ci=1), tap-major
    w2_ref:  (K2*C1, C2)    conv2 weights, row index = k*C1 + ci
    w3_ref:  (K3*C2, C3)    conv3 weights, row index = k*C2 + ci
    wf1_ref: (L3*C3, H1)    fc1 weight, rows reordered to (l, c)-major
    wf2_ref: (1, H1)        fc2 weight row
    b*_ref:  (1, C)         biases (bf2_ref is (1, 1))
    o_ref:   (TN, 1)        output tile
    p1/p2/p3_ref:           zero-halo padded activation scratches (VMEM)
    """
    TN, L = x_ref.shape
    K1, C1 = w1_ref.shape
    C2 = w2_ref.shape[1]
    C3 = w3_ref.shape[1]
    K2 = w2_ref.shape[0] // C1
    K3 = w3_ref.shape[0] // C2
    H1 = wf1_ref.shape[1]
    L1, L2, L3 = L // 2, L // 4, L // 8
    f32 = jnp.float32

    # Zero only the halo bands (the interiors are fully overwritten below).
    p1_ref[:, pl.ds(0, HALO), :] = jnp.zeros((TN, HALO, C1), f32)
    p1_ref[:, pl.ds(HALO + L, HALO), :] = jnp.zeros((TN, HALO, C1), f32)
    p2_ref[:, pl.ds(0, HALO), :] = jnp.zeros((TN, HALO, C1), f32)
    p2_ref[:, pl.ds(HALO + L1, HALO), :] = jnp.zeros((TN, HALO, C1), f32)
    p3_ref[:, pl.ds(0, HALO), :] = jnp.zeros((TN, HALO, C2), f32)
    p3_ref[:, pl.ds(HALO + L2, HALO), :] = jnp.zeros((TN, HALO, C2), f32)

    # ---- conv1 (1 -> C1, K=5, pad=2) + ReLU + MaxPool(2): dense VPU FMAs ----
    # Broadcast the single input channel across C1 lanes once, then run
    # contiguous per-tap FMAs on the padded channels-last buffer.
    x_cl = jnp.broadcast_to(x_ref[...][:, :, None], (TN, L, C1))
    p1_ref[:, pl.ds(HALO, L), :] = x_cl
    w1 = w1_ref[...]                                      # (K1, C1)
    base1 = HALO - K1 // 2
    acc1 = jnp.zeros((TN, L, C1), f32)
    for k in range(K1):                                   # static unroll, 5 taps
        acc1 = acc1 + p1_ref[:, pl.ds(base1 + k, L), :] * w1[k, :][None, None, :]
    y1 = jnp.maximum(acc1 + b1_ref[...], 0.0)             # (TN, L, C1)
    pool1 = y1.reshape(TN, L1, 2, C1).max(axis=2)         # (TN, L1, C1)

    # ---- conv2 (C1 -> C2, K=3, pad=1) + ReLU + MaxPool(2): one deep matmul --
    p2_ref[:, pl.ds(HALO, L1), :] = pool1
    base2 = HALO - K2 // 2
    xcat2 = jnp.concatenate(
        [p2_ref[:, pl.ds(base2 + k, L1), :] for k in range(K2)], axis=-1)
    y2 = jnp.dot(xcat2.reshape(TN * L1, K2 * C1), w2_ref[...],
                 preferred_element_type=f32)               # (TN*L1, C2)
    y2 = jnp.maximum(y2 + b2_ref[...], 0.0)
    pool2 = y2.reshape(TN, L2, 2, C2).max(axis=2)          # (TN, L2, C2)

    # ---- conv3 (C2 -> C3, K=3, pad=1) + ReLU + MaxPool(2): one deep matmul --
    p3_ref[:, pl.ds(HALO, L2), :] = pool2
    base3 = HALO - K3 // 2
    xcat3 = jnp.concatenate(
        [p3_ref[:, pl.ds(base3 + k, L2), :] for k in range(K3)], axis=-1)
    y3 = jnp.dot(xcat3.reshape(TN * L2, K3 * C2), w3_ref[...],
                 preferred_element_type=f32)               # (TN*L2, C3)
    y3 = jnp.maximum(y3 + b3_ref[...], 0.0)
    pool3 = y3.reshape(TN, L3, 2, C3).max(axis=2)          # (TN, L3, C3)

    # ---- flatten + fc1 + ReLU: one fused matmul -----------------------------
    feats = pool3.reshape(TN, L3 * C3)                     # (l, c)-major flatten
    h = jnp.dot(feats, wf1_ref[...], preferred_element_type=f32)
    h = jnp.maximum(h + bf1_ref[...], 0.0)                 # (TN, H1)
    # TODO(synk): nn.Dropout(0.4) is identity in eval mode; training-mode
    # stochastic masking is not implemented.

    # ---- fc2 (H1 -> 1): VPU multiply + lane reduction ------------------------
    o_ref[...] = jnp.sum(h * wf2_ref[...], axis=-1, keepdims=True) + bf2_ref[...]


def preprocess_params(params):
    """One-time conversion of PyTorch-convention params to kernel layouts."""
    (w1c, b1c), (w2c, b2c), (w3c, b3c), (wf1, bf1), (wf2, bf2) = params
    C3 = w3c.shape[0]
    H1 = wf1.shape[0]
    L3 = wf1.shape[1] // C3
    w1p = jnp.transpose(w1c[:, 0, :])                                  # (K1, C1)
    w2p = jnp.transpose(w2c, (2, 1, 0)).reshape(-1, w2c.shape[0])      # (K2*C1, C2)
    w3p = jnp.transpose(w3c, (2, 1, 0)).reshape(-1, w3c.shape[0])      # (K3*C2, C3)
    # PyTorch flatten is channel-major (c*L3 + l); kernel activations are
    # position-major (l*C3 + c) -> reorder fc1 weight rows once.
    wf1p = jnp.transpose(wf1.reshape(H1, C3, L3), (2, 1, 0)).reshape(L3 * C3, H1)
    return (w1p, b1c.reshape(1, -1), w2p, b2c.reshape(1, -1),
            w3p, b3c.reshape(1, -1), wf1p, bf1.reshape(1, -1),
            wf2.reshape(1, -1), bf2.reshape(1, 1))


def _pick_batch_tile(n, cap=8):
    """Largest batch tile <= cap whose block shape is valid (mult. of 8 or == n)."""
    if n <= cap:
        return n
    for t in range(cap, 0, -1):
        if n % t == 0 and t % 8 == 0:
            return t
    return n  # fall back to full batch in a single grid step (always valid)


def spectral_cnn_forward(x_ncl, pp):
    (w1p, b1p, w2p, b2p, w3p, b3p, wf1p, bf1p, wf2p, bf2p) = pp
    N, _, L = x_ncl.shape
    assert L % 64 == 0, "in-kernel reshapes assume L//8 is a multiple of 8"
    C1 = w1p.shape[1]
    C2 = w2p.shape[1]
    x2d = x_ncl.reshape(N, L)              # (N,1,L) -> (N,L): free reshape
    tn = _pick_batch_tile(N)
    L1, L2 = L // 2, L // 4

    def _const(shape):                     # weights stay VMEM-resident
        return pl.BlockSpec(shape, lambda b: (0, 0))

    weights = (w1p, b1p, w2p, b2p, w3p, b3p, wf1p, bf1p, wf2p, bf2p)
    return pl.pallas_call(
        _spectral_cnn_kernel,
        out_shape=jax.ShapeDtypeStruct((N, 1), jnp.float32),
        grid=(N // tn,),
        in_specs=[pl.BlockSpec((tn, L), lambda b: (b, 0))]
                + [_const(w.shape) for w in weights],
        out_specs=pl.BlockSpec((tn, 1), lambda b: (b, 0)),
        scratch_shapes=[
            pltpu.VMEM((tn, L + 2 * HALO, C1), jnp.float32),   # padded conv1 in
            pltpu.VMEM((tn, L1 + 2 * HALO, C1), jnp.float32),  # padded pool1
            pltpu.VMEM((tn, L2 + 2 * HALO, C2), jnp.float32),  # padded pool2
        ],
        compiler_params=pltpu.CompilerParams(
            dimension_semantics=("parallel",),
            vmem_limit_bytes=48 * 1024 * 1024),
    )(x2d, *weights)


def reference_forward(x_ncl, params):
    """Pure-JAX reference matching the PyTorch forward (NCL layout)."""
    (w1c, b1c), (w2c, b2c), (w3c, b3c), (wf1, bf1), (wf2, bf2) = params

    def conv(x, w, b, pad):
        y = jax.lax.conv_general_dilated(
            x, w, window_strides=(1,), padding=[(pad, pad)],
            dimension_numbers=("NCH", "OIH", "NCH"))
        return y + b[None, :, None]

    def pool(x):
        n, c, l = x.shape
        return x.reshape(n, c, l // 2, 2).max(axis=-1)

    y = pool(jax.nn.relu(conv(x_ncl, w1c, b1c, 2)))
    y = pool(jax.nn.relu(conv(y, w2c, b2c, 1)))
    y = pool(jax.nn.relu(conv(y, w3c, b3c, 1)))
    feats = y.reshape(y.shape[0], -1)
    h = jax.nn.relu(feats @ wf1.T + bf1)
    return h @ wf2.T + bf2


if __name__ == "__main__":
    # Small shapes: input_length = 64 (multiple of 64), batch = 2.
    L = 64
    N = 2
    key = jax.random.PRNGKey(0)
    ks = jax.random.split(key, 11)
    scale = 0.05
    # Deterministic synthetic parameters in PyTorch conventions:
    w1c = scale * jax.random.normal(ks[0], (32, 1, 5), jnp.float32)    # Conv1d(1,32,5)
    b1c = scale * jax.random.normal(ks[1], (32,), jnp.float32)
    w2c = scale * jax.random.normal(ks[2], (64, 32, 3), jnp.float32)   # Conv1d(32,64,3)
    b2c = scale * jax.random.normal(ks[3], (64,), jnp.float32)
    w3c = scale * jax.random.normal(ks[4], (128, 64, 3), jnp.float32)  # Conv1d(64,128,3)
    b3c = scale * jax.random.normal(ks[5], (128,), jnp.float32)
    wf1 = scale * jax.random.normal(ks[6], (128, 128 * (L // 8)), jnp.float32)
    bf1 = scale * jax.random.normal(ks[7], (128,), jnp.float32)
    wf2 = scale * jax.random.normal(ks[8], (1, 128), jnp.float32)      # Linear(128,1)
    bf2 = scale * jax.random.normal(ks[9], (1,), jnp.float32)
    params = ((w1c, b1c), (w2c, b2c), (w3c, b3c), (wf1, bf1), (wf2, bf2))

    pp = preprocess_params(params)          # one-time, outside the forward path
    x = jax.random.normal(ks[10], (N, 1, L), jnp.float32)              # PyTorch NCL

    out = jax.block_until_ready(jax.jit(spectral_cnn_forward)(x, pp))
    ref = jax.block_until_ready(reference_forward(x, params))
    assert out.shape == (N, 1), out.shape
    assert jnp.allclose(out, ref, atol=1e-3, rtol=1e-3), (out, ref)
    print("KERNEL_OK")
</pallas_src>

<mosaic_0001>
module attributes {stable_mosaic.version = 11 : i64} {
  func.func @_spectral_cnn_kernel(%arg0: i32, %arg1: memref<2x64xf32, #tpu.memory_space<vmem>>, %arg2: memref<5x32xf32, #tpu.memory_space<vmem>>, %arg3: memref<1x32xf32, #tpu.memory_space<vmem>>, %arg4: memref<96x64xf32, #tpu.memory_space<vmem>>, %arg5: memref<1x64xf32, #tpu.memory_space<vmem>>, %arg6: memref<192x128xf32, #tpu.memory_space<vmem>>, %arg7: memref<1x128xf32, #tpu.memory_space<vmem>>, %arg8: memref<1024x128xf32, #tpu.memory_space<vmem>>, %arg9: memref<1x128xf32, #tpu.memory_space<vmem>>, %arg10: memref<1x128xf32, #tpu.memory_space<vmem>>, %arg11: memref<1x1xf32, #tpu.memory_space<vmem>>, %arg12: memref<2x1xf32, #tpu.memory_space<vmem>>, %arg13: memref<2x80x32xf32, #tpu.memory_space<vmem>>, %arg14: memref<2x48x32xf32, #tpu.memory_space<vmem>>, %arg15: memref<2x32x64xf32, #tpu.memory_space<vmem>>) attributes {dimension_semantics = [#tpu.dimension_semantics<parallel>], iteration_bounds = array<i64: 1>, scalar_prefetch = 0 : i64, scratch_operands = 3 : i64, tpu.core_type = #tpu.core_type<tc>, window_params = [{transform_indices = @transform_0, window_bounds = array<i64: 2, 64>}, {pipeline_mode = #tpu.pipeline_mode<synchronous>, transform_indices = @transform_1, window_bounds = array<i64: 5, 32>}, {pipeline_mode = #tpu.pipeline_mode<synchronous>, transform_indices = @transform_2, window_bounds = array<i64: 1, 32>}, {pipeline_mode = #tpu.pipeline_mode<synchronous>, transform_indices = @transform_3, window_bounds = array<i64: 96, 64>}, {pipeline_mode = #tpu.pipeline_mode<synchronous>, transform_indices = @transform_4, window_bounds = array<i64: 1, 64>}, {pipeline_mode = #tpu.pipeline_mode<synchronous>, transform_indices = @transform_5, window_bounds = array<i64: 192, 128>}, {pipeline_mode = #tpu.pipeline_mode<synchronous>, transform_indices = @transform_6, window_bounds = array<i64: 1, 128>}, {pipeline_mode = #tpu.pipeline_mode<synchronous>, transform_indices = @transform_7, window_bounds = array<i64: 1024, 128>}, {pipeline_mode = #tpu.pipeline_mode<synchronous>, transform_indices = @transform_8, window_bounds = array<i64: 1, 128>}, {pipeline_mode = #tpu.pipeline_mode<synchronous>, transform_indices = @transform_9, window_bounds = array<i64: 1, 128>}, {pipeline_mode = #tpu.pipeline_mode<synchronous>, transform_indices = @transform_10, window_bounds = array<i64: 1, 1>}, {transform_indices = @transform_11, window_bounds = array<i64: 2, 1>}]} {
    %cst = arith.constant 0.000000e+00 : f32
    %0 = vector.broadcast %cst : f32 to vector<2x8x32xf32>
    %c0 = arith.constant 0 : index
    %c0_0 = arith.constant 0 : index
    %c0_1 = arith.constant 0 : index
    %1 = vector.load %arg13[%c0, %c0_0, %c0_1] : memref<2x80x32xf32, #tpu.memory_space<vmem>>, vector<2x8x32xf32>
    tpu.vector_store %arg13[%c0, %c0_0, %c0_1], %0 {strides = array<i32>} : memref<2x80x32xf32, #tpu.memory_space<vmem>>, vector<2x8x32xf32>,
    %cst_2 = arith.constant 0.000000e+00 : f32
    %2 = vector.broadcast %cst_2 : f32 to vector<2x8x32xf32>
    %c0_3 = arith.constant 0 : index
    %c72 = arith.constant 72 : index
    %c0_4 = arith.constant 0 : index
    %3 = vector.load %arg13[%c0_3, %c72, %c0_4] : memref<2x80x32xf32, #tpu.memory_space<vmem>>, vector<2x8x32xf32>
    tpu.vector_store %arg13[%c0_3, %c72, %c0_4], %2 {strides = array<i32>} : memref<2x80x32xf32, #tpu.memory_space<vmem>>, vector<2x8x32xf32>,
    %cst_5 = arith.constant 0.000000e+00 : f32
    %4 = vector.broadcast %cst_5 : f32 to vector<2x8x32xf32>
    %c0_6 = arith.constant 0 : index
    %c0_7 = arith.constant 0 : index
    %c0_8 = arith.constant 0 : index
    %5 = vector.load %arg14[%c0_6, %c0_7, %c0_8] : memref<2x48x32xf32, #tpu.memory_space<vmem>>, vector<2x8x32xf32>
    tpu.vector_store %arg14[%c0_6, %c0_7, %c0_8], %4 {strides = array<i32>} : memref<2x48x32xf32, #tpu.memory_space<vmem>>, vector<2x8x32xf32>,
    %cst_9 = arith.constant 0.000000e+00 : f32
    %6 = vector.broadcast %cst_9 : f32 to vector<2x8x32xf32>
    %c0_10 = arith.constant 0 : index
    %c40 = arith.constant 40 : index
    %c0_11 = arith.constant 0 : index
    %7 = vector.load %arg14[%c0_10, %c40, %c0_11] : memref<2x48x32xf32, #tpu.memory_space<vmem>>, vector<2x8x32xf32>
    tpu.vector_store %arg14[%c0_10, %c40, %c0_11], %6 {strides = array<i32>} : memref<2x48x32xf32, #tpu.memory_space<vmem>>, vector<2x8x32xf32>,
    %cst_12 = arith.constant 0.000000e+00 : f32
    %8 = vector.broadcast %cst_12 : f32 to vector<2x8x64xf32>
    %c0_13 = arith.constant 0 : index
    %c0_14 = arith.constant 0 : index
    %c0_15 = arith.constant 0 : index
    %9 = vector.load %arg15[%c0_13, %c0_14, %c0_15] : memref<2x32x64xf32, #tpu.memory_space<vmem>>, vector<2x8x64xf32>
    tpu.vector_store %arg15[%c0_13, %c0_14, %c0_15], %8 {strides = array<i32>} : memref<2x32x64xf32, #tpu.memory_space<vmem>>, vector<2x8x64xf32>,
    %cst_16 = arith.constant 0.000000e+00 : f32
    %10 = vector.broadcast %cst_16 : f32 to vector<2x8x64xf32>
    %c0_17 = arith.constant 0 : index
    %c24 = arith.constant 24 : index
    %c0_18 = arith.constant 0 : index
    %11 = vector.load %arg15[%c0_17, %c24, %c0_18] : memref<2x32x64xf32, #tpu.memory_space<vmem>>, vector<2x8x64xf32>
    tpu.vector_store %arg15[%c0_17, %c24, %c0_18], %10 {strides = array<i32>} : memref<2x32x64xf32, #tpu.memory_space<vmem>>, vector<2x8x64xf32>,
    %c0_19 = arith.constant 0 : index
    %c0_20 = arith.constant 0 : index
    %12 = vector.load %arg1[%c0_19, %c0_20] : memref<2x64xf32, #tpu.memory_space<vmem>>, vector<2x64xf32>
    %13 = vector.shape_cast %12 : vector<2x64xf32> to vector<2x64x1xf32>
    %14 = vector.shape_cast %13 : vector<2x64x1xf32> to vector<2x64x1xf32>
    %15 = vector.broadcast %14 : vector<2x64x1xf32> to vector<2x64x32xf32>
    %c0_21 = arith.constant 0 : index
    %c8 = arith.constant 8 : index
    %c0_22 = arith.constant 0 : index
    %16 = vector.load %arg13[%c0_21, %c8, %c0_22] : memref<2x80x32xf32, #tpu.memory_space<vmem>>, vector<2x64x32xf32>
    tpu.vector_store %arg13[%c0_21, %c8, %c0_22], %15 {strides = array<i32>} : memref<2x80x32xf32, #tpu.memory_space<vmem>>, vector<2x64x32xf32>,
    %c0_23 = arith.constant 0 : index
    %c0_24 = arith.constant 0 : index
    %17 = vector.load %arg2[%c0_23, %c0_24] : memref<5x32xf32, #tpu.memory_space<vmem>>, vector<5x32xf32>
    %cst_25 = arith.constant 0.000000e+00 : f32
    %18 = vector.broadcast %cst_25 : f32 to vector<2x64x32xf32>
    %c0_26 = arith.constant 0 : index
    %c6 = arith.constant 6 : index
    %c0_27 = arith.constant 0 : index
    %19 = vector.load %arg13[%c0_26, %c6, %c0_27] : memref<2x80x32xf32, #tpu.memory_space<vmem>>, vector<2x64x32xf32>
    %20 = vector.extract_strided_slice %17 {offsets = [0, 0], sizes = [1, 32], strides = [1, 1]} : vector<5x32xf32> to vector<1x32xf32>
    %21 = vector.shape_cast %20 : vector<1x32xf32> to vector<32xf32>
    %22 = vector.shape_cast %21 : vector<32xf32> to vector<1x1x32xf32>
    %23 = vector.broadcast %22 : vector<1x1x32xf32> to vector<2x64x32xf32>
    %24 = arith.mulf %19, %23 : vector<2x64x32xf32>
    %25 = arith.addf %18, %24 : vector<2x64x32xf32>
    %c0_28 = arith.constant 0 : index
    %c7 = arith.constant 7 : index
    %c0_29 = arith.constant 0 : index
    %26 = vector.load %arg13[%c0_28, %c7, %c0_29] : memref<2x80x32xf32, #tpu.memory_space<vmem>>, vector<2x64x32xf32>
    %27 = vector.extract_strided_slice %17 {offsets = [1, 0], sizes = [1, 32], strides = [1, 1]} : vector<5x32xf32> to vector<1x32xf32>
    %28 = vector.shape_cast %27 : vector<1x32xf32> to vector<32xf32>
    %29 = vector.shape_cast %28 : vector<32xf32> to vector<1x1x32xf32>
    %30 = vector.broadcast %29 : vector<1x1x32xf32> to vector<2x64x32xf32>
    %31 = arith.mulf %26, %30 : vector<2x64x32xf32>
    %32 = arith.addf %25, %31 : vector<2x64x32xf32>
    %c0_30 = arith.constant 0 : index
    %c8_31 = arith.constant 8 : index
    %c0_32 = arith.constant 0 : index
    %33 = vector.load %arg13[%c0_30, %c8_31, %c0_32] : memref<2x80x32xf32, #tpu.memory_space<vmem>>, vector<2x64x32xf32>
    %34 = vector.extract_strided_slice %17 {offsets = [2, 0], sizes = [1, 32], strides = [1, 1]} : vector<5x32xf32> to vector<1x32xf32>
    %35 = vector.shape_cast %34 : vector<1x32xf32> to vector<32xf32>
    %36 = vector.shape_cast %35 : vector<32xf32> to vector<1x1x32xf32>
    %37 = vector.broadcast %36 : vector<1x1x32xf32> to vector<2x64x32xf32>
    %38 = arith.mulf %33, %37 : vector<2x64x32xf32>
    %39 = arith.addf %32, %38 : vector<2x64x32xf32>
    %c0_33 = arith.constant 0 : index
    %c9 = arith.constant 9 : index
    %c0_34 = arith.constant 0 : index
    %40 = vector.load %arg13[%c0_33, %c9, %c0_34] : memref<2x80x32xf32, #tpu.memory_space<vmem>>, vector<2x64x32xf32>
    %41 = vector.extract_strided_slice %17 {offsets = [3, 0], sizes = [1, 32], strides = [1, 1]} : vector<5x32xf32> to vector<1x32xf32>
    %42 = vector.shape_cast %41 : vector<1x32xf32> to vector<32xf32>
    %43 = vector.shape_cast %42 : vector<32xf32> to vector<1x1x32xf32>
    %44 = vector.broadcast %43 : vector<1x1x32xf32> to vector<2x64x32xf32>
    %45 = arith.mulf %40, %44 : vector<2x64x32xf32>
    %46 = arith.addf %39, %45 : vector<2x64x32xf32>
    %c0_35 = arith.constant 0 : index
    %c10 = arith.constant 10 : index
    %c0_36 = arith.constant 0 : index
    %47 = vector.load %arg13[%c0_35, %c10, %c0_36] : memref<2x80x32xf32, #tpu.memory_space<vmem>>, vector<2x64x32xf32>
    %48 = vector.extract_strided_slice %17 {offsets = [4, 0], sizes = [1, 32], strides = [1, 1]} : vector<5x32xf32> to vector<1x32xf32>
    %49 = vector.shape_cast %48 : vector<1x32xf32> to vector<32xf32>
    %50 = vector.shape_cast %49 : vector<32xf32> to vector<1x1x32xf32>
    %51 = vector.broadcast %50 : vector<1x1x32xf32> to vector<2x64x32xf32>
    %52 = arith.mulf %47, %51 : vector<2x64x32xf32>
    %53 = arith.addf %46, %52 : vector<2x64x32xf32>
    %c0_37 = arith.constant 0 : index
    %c0_38 = arith.constant 0 : index
    %54 = vector.load %arg3[%c0_37, %c0_38] : memref<1x32xf32, #tpu.memory_space<vmem>>, vector<1x32xf32>
    %55 = vector.shape_cast %54 : vector<1x32xf32> to vector<1x1x32xf32>
    %56 = vector.broadcast %55 : vector<1x1x32xf32> to vector<2x64x32xf32>
    %57 = arith.addf %53, %56 : vector<2x64x32xf32>
    %cst_39 = arith.constant 0.000000e+00 : f32
    %58 = vector.broadcast %cst_39 : f32 to vector<2x64x32xf32>
    %59 = arith.maximumf %57, %58 : vector<2x64x32xf32>
    %60 = vector.shape_cast %59 : vector<2x64x32xf32> to vector<2x32x2x32xf32>
    %cst_40 = arith.constant dense<0xFF800000> : vector<2x32x32xf32>
    %61 = vector.multi_reduction <maximumf>, %60, %cst_40 [2] : vector<2x32x2x32xf32> to vector<2x32x32xf32>
    %c0_41 = arith.constant 0 : index
    %c8_42 = arith.constant 8 : index
    %c0_43 = arith.constant 0 : index
    %62 = vector.load %arg14[%c0_41, %c8_42, %c0_43] : memref<2x48x32xf32, #tpu.memory_space<vmem>>, vector<2x32x32xf32>
    tpu.vector_store %arg14[%c0_41, %c8_42, %c0_43], %61 {strides = array<i32>} : memref<2x48x32xf32, #tpu.memory_space<vmem>>, vector<2x32x32xf32>,
    %c0_44 = arith.constant 0 : index
    %c7_45 = arith.constant 7 : index
    %c0_46 = arith.constant 0 : index
    %63 = vector.load %arg14[%c0_44, %c7_45, %c0_46] : memref<2x48x32xf32, #tpu.memory_space<vmem>>, vector<2x32x32xf32>
    %c0_47 = arith.constant 0 : index
    %c8_48 = arith.constant 8 : index
    %c0_49 = arith.constant 0 : index
    %64 = vector.load %arg14[%c0_47, %c8_48, %c0_49] : memref<2x48x32xf32, #tpu.memory_space<vmem>>, vector<2x32x32xf32>
    %c0_50 = arith.constant 0 : index
    %c9_51 = arith.constant 9 : index
    %c0_52 = arith.constant 0 : index
    %65 = vector.load %arg14[%c0_50, %c9_51, %c0_52] : memref<2x48x32xf32, #tpu.memory_space<vmem>>, vector<2x32x32xf32>
    %66 = tpu.concatenate %63, %64, %65 in 2 : vector<2x32x32xf32>, vector<2x32x32xf32>, vector<2x32x32xf32> -> vector<2x32x96xf32>
    %67 = vector.shape_cast %66 : vector<2x32x96xf32> to vector<64x96xf32>
    %c0_53 = arith.constant 0 : index
    %c0_54 = arith.constant 0 : index
    %68 = vector.load %arg4[%c0_53, %c0_54] : memref<96x64xf32, #tpu.memory_space<vmem>>, vector<96x64xf32>
    %cst_55 = arith.constant dense<0.000000e+00> : vector<64x64xf32>
    %69 = tpu.matmul %67, %68, %cst_55 {dimension_numbers = #tpu.dot_dimension_numbers<[1], [0], [0], [1], [0, 0, 1, 1], [], []>} : vector<64x96xf32>, vector<96x64xf32>, vector<64x64xf32> -> vector<64x64xf32>
    %c0_56 = arith.constant 0 : index
    %c0_57 = arith.constant 0 : index
    %70 = vector.load %arg5[%c0_56, %c0_57] : memref<1x64xf32, #tpu.memory_space<vmem>>, vector<1x64xf32>
    %71 = vector.broadcast %70 : vector<1x64xf32> to vector<64x64xf32>
    %72 = arith.addf %69, %71 : vector<64x64xf32>
    %cst_58 = arith.constant 0.000000e+00 : f32
    %73 = vector.broadcast %cst_58 : f32 to vector<64x64xf32>
    %74 = arith.maximumf %72, %73 : vector<64x64xf32>
    %75 = vector.shape_cast %74 : vector<64x64xf32> to vector<2x16x2x64xf32>
    %cst_59 = arith.constant dense<0xFF800000> : vector<2x16x64xf32>
    %76 = vector.multi_reduction <maximumf>, %75, %cst_59 [2] : vector<2x16x2x64xf32> to vector<2x16x64xf32>
    %c0_60 = arith.constant 0 : index
    %c8_61 = arith.constant 8 : index
    %c0_62 = arith.constant 0 : index
    %77 = vector.load %arg15[%c0_60, %c8_61, %c0_62] : memref<2x32x64xf32, #tpu.memory_space<vmem>>, vector<2x16x64xf32>
    tpu.vector_store %arg15[%c0_60, %c8_61, %c0_62], %76 {strides = array<i32>} : memref<2x32x64xf32, #tpu.memory_space<vmem>>, vector<2x16x64xf32>,
    %c0_63 = arith.constant 0 : index
    %c7_64 = arith.constant 7 : index
    %c0_65 = arith.constant 0 : index
    %78 = vector.load %arg15[%c0_63, %c7_64, %c0_65] : memref<2x32x64xf32, #tpu.memory_space<vmem>>, vector<2x16x64xf32>
    %c0_66 = arith.constant 0 : index
    %c8_67 = arith.constant 8 : index
    %c0_68 = arith.constant 0 : index
    %79 = vector.load %arg15[%c0_66, %c8_67, %c0_68] : memref<2x32x64xf32, #tpu.memory_space<vmem>>, vector<2x16x64xf32>
    %c0_69 = arith.constant 0 : index
    %c9_70 = arith.constant 9 : index
    %c0_71 = arith.constant 0 : index
    %80 = vector.load %arg15[%c0_69, %c9_70, %c0_71] : memref<2x32x64xf32, #tpu.memory_space<vmem>>, vector<2x16x64xf32>
    %81 = tpu.concatenate %78, %79, %80 in 2 : vector<2x16x64xf32>, vector<2x16x64xf32>, vector<2x16x64xf32> -> vector<2x16x192xf32>
    %82 = vector.shape_cast %81 : vector<2x16x192xf32> to vector<32x192xf32>
    %c0_72 = arith.constant 0 : index
    %c0_73 = arith.constant 0 : index
    %83 = vector.load %arg6[%c0_72, %c0_73] : memref<192x128xf32, #tpu.memory_space<vmem>>, vector<192x128xf32>
    %cst_74 = arith.constant dense<0.000000e+00> : vector<32x128xf32>
    %84 = tpu.matmul %82, %83, %cst_74 {dimension_numbers = #tpu.dot_dimension_numbers<[1], [0], [0], [1], [0, 0, 1, 1], [], []>} : vector<32x192xf32>, vector<192x128xf32>, vector<32x128xf32> -> vector<32x128xf32>
    %c0_75 = arith.constant 0 : index
    %c0_76 = arith.constant 0 : index
    %85 = vector.load %arg7[%c0_75, %c0_76] : memref<1x128xf32, #tpu.memory_space<vmem>>, vector<1x128xf32>
    %86 = vector.broadcast %85 : vector<1x128xf32> to vector<32x128xf32>
    %87 = arith.addf %84, %86 : vector<32x128xf32>
    %cst_77 = arith.constant 0.000000e+00 : f32
    %88 = vector.broadcast %cst_77 : f32 to vector<32x128xf32>
    %89 = arith.maximumf %87, %88 : vector<32x128xf32>
    %90 = vector.shape_cast %89 : vector<32x128xf32> to vector<2x8x2x128xf32>
    %cst_78 = arith.constant dense<0xFF800000> : vector<2x8x128xf32>
    %91 = vector.multi_reduction <maximumf>, %90, %cst_78 [2] : vector<2x8x2x128xf32> to vector<2x8x128xf32>
    %92 = vector.shape_cast %91 : vector<2x8x128xf32> to vector<2x1024xf32>
    %c0_79 = arith.constant 0 : index
    %c0_80 = arith.constant 0 : index
    %93 = vector.load %arg8[%c0_79, %c0_80] : memref<1024x128xf32, #tpu.memory_space<vmem>>, vector<1024x128xf32>
    %cst_81 = arith.constant dense<0.000000e+00> : vector<2x128xf32>
    %94 = tpu.matmul %92, %93, %cst_81 {dimension_numbers = #tpu.dot_dimension_numbers<[1], [0], [0], [1], [0, 0, 1, 1], [], []>} : vector<2x1024xf32>, vector<1024x128xf32>, vector<2x128xf32> -> vector<2x128xf32>
    %c0_82 = arith.constant 0 : index
    %c0_83 = arith.constant 0 : index
    %95 = vector.load %arg9[%c0_82, %c0_83] : memref<1x128xf32, #tpu.memory_space<vmem>>, vector<1x128xf32>
    %96 = vector.broadcast %95 : vector<1x128xf32> to vector<2x128xf32>
    %97 = arith.addf %94, %96 : vector<2x128xf32>
    %cst_84 = arith.constant 0.000000e+00 : f32
    %98 = vector.broadcast %cst_84 : f32 to vector<2x128xf32>
    %99 = arith.maximumf %97, %98 : vector<2x128xf32>
    %c0_85 = arith.constant 0 : index
    %c0_86 = arith.constant 0 : index
    %100 = vector.load %arg10[%c0_85, %c0_86] : memref<1x128xf32, #tpu.memory_space<vmem>>, vector<1x128xf32>
    %101 = vector.broadcast %100 : vector<1x128xf32> to vector<2x128xf32>
    %102 = arith.mulf %99, %101 : vector<2x128xf32>
    %cst_87 = arith.constant dense<0.000000e+00> : vector<2xf32>
    %103 = vector.multi_reduction <add>, %102, %cst_87 [1] : vector<2x128xf32> to vector<2xf32>
    %104 = vector.shape_cast %103 : vector<2xf32> to vector<2x1xf32>
    %c0_88 = arith.constant 0 : index
    %c0_89 = arith.constant 0 : index
    %105 = vector.load %arg11[%c0_88, %c0_89] : memref<1x1xf32, #tpu.memory_space<vmem>>, vector<1x1xf32>
    %106 = vector.broadcast %105 : vector<1x1xf32> to vector<2x1xf32>
    %107 = arith.addf %104, %106 : vector<2x1xf32>
    %c0_90 = arith.constant 0 : index
    %c0_91 = arith.constant 0 : index
    %108 = vector.load %arg12[%c0_90, %c0_91] : memref<2x1xf32, #tpu.memory_space<vmem>>, vector<2x1xf32>
    tpu.vector_store %arg12[%c0_90, %c0_91], %107 {strides = array<i32>} : memref<2x1xf32, #tpu.memory_space<vmem>>, vector<2x1xf32>,
    return
  }
  func.func @transform_0(%arg0: i32) -> (i32, i32) {
    %c0_i32 = arith.constant 0 : i32
    %c0_i32_0 = arith.constant 0 : i32
    return %arg0, %c0_i32 : i32, i32
  }
  func.func @transform_1(%arg0: i32) -> (i32, i32) {
    %c0_i32 = arith.constant 0 : i32
    %c0_i32_0 = arith.constant 0 : i32
    %c0_i32_1 = arith.constant 0 : i32
    return %c0_i32, %c0_i32_0 : i32, i32
  }
  func.func @transform_2(%arg0: i32) -> (i32, i32) {
    %c0_i32 = arith.constant 0 : i32
    %c0_i32_0 = arith.constant 0 : i32
    %c0_i32_1 = arith.constant 0 : i32
    return %c0_i32, %c0_i32_0 : i32, i32
  }
  func.func @transform_3(%arg0: i32) -> (i32, i32) {
    %c0_i32 = arith.constant 0 : i32
    %c0_i32_0 = arith.constant 0 : i32
    %c0_i32_1 = arith.constant 0 : i32
    return %c0_i32, %c0_i32_0 : i32, i32
  }
  func.func @transform_4(%arg0: i32) -> (i32, i32) {
    %c0_i32 = arith.constant 0 : i32
    %c0_i32_0 = arith.constant 0 : i32
    %c0_i32_1 = arith.constant 0 : i32
    return %c0_i32, %c0_i32_0 : i32, i32
  }
  func.func @transform_5(%arg0: i32) -> (i32, i32) {
    %c0_i32 = arith.constant 0 : i32
    %c0_i32_0 = arith.constant 0 : i32
    %c0_i32_1 = arith.constant 0 : i32
    return %c0_i32, %c0_i32_0 : i32, i32
  }
  func.func @transform_6(%arg0: i32) -> (i32, i32) {
    %c0_i32 = arith.constant 0 : i32
    %c0_i32_0 = arith.constant 0 : i32
    %c0_i32_1 = arith.constant 0 : i32
    return %c0_i32, %c0_i32_0 : i32, i32
  }
  func.func @transform_7(%arg0: i32) -> (i32, i32) {
    %c0_i32 = arith.constant 0 : i32
    %c0_i32_0 = arith.constant 0 : i32
    %c0_i32_1 = arith.constant 0 : i32
    return %c0_i32, %c0_i32_0 : i32, i32
  }
  func.func @transform_8(%arg0: i32) -> (i32, i32) {
    %c0_i32 = arith.constant 0 : i32
    %c0_i32_0 = arith.constant 0 : i32
    %c0_i32_1 = arith.constant 0 : i32
    return %c0_i32, %c0_i32_0 : i32, i32
  }
  func.func @transform_9(%arg0: i32) -> (i32, i32) {
    %c0_i32 = arith.constant 0 : i32
    %c0_i32_0 = arith.constant 0 : i32
    %c0_i32_1 = arith.constant 0 : i32
    return %c0_i32, %c0_i32_0 : i32, i32
  }
  func.func @transform_10(%arg0: i32) -> (i32, i32) {
    %c0_i32 = arith.constant 0 : i32
    %c0_i32_0 = arith.constant 0 : i32
    %c0_i32_1 = arith.constant 0 : i32
    return %c0_i32, %c0_i32_0 : i32, i32
  }
  func.func @transform_11(%arg0: i32) -> (i32, i32) {
    %c0_i32 = arith.constant 0 : i32
    %c0_i32_0 = arith.constant 0 : i32
    return %arg0, %c0_i32 : i32, i32
  }
}

</mosaic_0001>

<llo_original>
// kernel: spectral_cnn_forward.1
$region0: #{spectral_cnn_forward.1}
  #allocation0 [shape = 'u32[]', space=smem, size = 0x4, offset = 0x4, fixed_abs, tag = 'smem constant byte address 0x4 - core index']
  #allocation1 [shape = 'u32[72,128]{1,0:T(1,128)}', space=vmem, size = 0x9000, scoped, tag = 'internal scratch']
  #allocation2 [shape = 'f32[2,80,32]{2,1,0:T(8,128)}', space=vmem, size = 0x14000, scoped, tag = 'scratch operand']
  #allocation3 [shape = 'f32[2,48,32]{2,1,0:T(8,128)}', space=vmem, size = 0xc000, scoped, tag = 'scratch operand']
  #allocation4 [shape = 'f32[2,32,64]{2,1,0:T(8,128)}', space=vmem, size = 0x8000, scoped, tag = 'scratch operand']
  #allocation5 [shape = 'f32[1,1]{1,0:T(1,128)S(1)}', space=vmem, size = 0x200, scoped, tag = 'scoped memory for spectral_cnn_forward.1']
  %s0 = inlined_call_operand.vmem [shape: f32[2,64], index: 0, kind: input, shape index: {}]
  %s1 = inlined_call_operand.vmem [shape: f32[5,32], index: 1, kind: input, shape index: {}]
  %s2 = inlined_call_operand.vmem [shape: f32[1,32], index: 2, kind: input, shape index: {}]
  %s3 = inlined_call_operand.vmem [shape: f32[96,64], index: 3, kind: input, shape index: {}]
  %s4 = inlined_call_operand.vmem [shape: f32[1,64], index: 4, kind: input, shape index: {}]
  %s5 = inlined_call_operand.hbm [shape: f32[192,128], index: 5, kind: input, shape index: {}]
  %s6 = inlined_call_operand.vmem [shape: f32[1,128], index: 6, kind: input, shape index: {}]
  %s7 = inlined_call_operand.hbm [shape: f32[1024,128], index: 7, kind: input, shape index: {}]
  %s8 = inlined_call_operand.vmem [shape: f32[1,128], index: 8, kind: input, shape index: {}]
  %s9 = inlined_call_operand.vmem [shape: f32[1,128], index: 9, kind: input, shape index: {}]
  %s10 = inlined_call_operand.<no memory space> [shape: f32[1,1], index: 10, kind: input, shape index: {}]
  %s11 = inlined_call_operand.vmem [shape: f32[2,1], index: 11, kind: output, shape index: {}]
  %s12 = sld [smem:[#allocation0]]
  $region62: #{spectral_cnn_forward.1} parent=0
    _
  %s14 = ssub.s32 1, %s12
  %s15 = scalar_select 0, %s14, %s12
  %v16 = vstv %s10
  %17 = vst [vmem:[#allocation5] sm:$0x1] %v16
  $region1: #{spectral_cnn_forward.1} parent=0
    #allocation6 [shape = 'u8[98304]{0}', space=vmem, size = 0x18000, scoped, tag = 'input window, operand 5, single buffered']
    #allocation7 [shape = 's32[1]{0}', space=sflag, size = 0x4, scoped, tag = 'scoped memory for spectral_cnn_forward.1']
    #allocation8 [shape = 'u8[524288]{0}', space=vmem, size = 0x80000, scoped, tag = 'input window, operand 7, single buffered']
    #allocation9 [shape = 's32[1]{0}', space=sflag, size = 0x4, scoped, tag = 'scoped memory for spectral_cnn_forward.1']
    %18 = vsyncpa [#allocation7], 0
    %19 = vsyncpa [#allocation9], 0
    // Predicated region
    $region2: #{spectral_cnn_forward.1} parent=1 // pred_check
      _
    $region3: #{spectral_cnn_forward.1} parent=1 // pred_check_branch
      %21 = sbr.rel (0) target = $region5
    $region4: #{spectral_cnn_forward.1} parent=1 // pred_region
      _
    $region5: #{spectral_cnn_forward.1} parent=1 // pred_fallthru
      _
    // Predicated region
    $region6: #{spectral_cnn_forward.1} parent=1 // pred_check
      _
    $region7: #{spectral_cnn_forward.1} parent=1 // pred_check_branch
      %23 = sbr.rel (0) target = $region9
    $region8: #{spectral_cnn_forward.1} parent=1 // pred_region
      _
    $region9: #{spectral_cnn_forward.1} parent=1 // pred_fallthru
      _
    // Predicated region
    $region10: #{spectral_cnn_forward.1} parent=1 // pred_check
      _
    $region11: #{spectral_cnn_forward.1} parent=1 // pred_check_branch
      %25 = sbr.rel (0) target = $region13
    $region12: #{spectral_cnn_forward.1} parent=1 // pred_region
      _
    $region13: #{spectral_cnn_forward.1} parent=1 // pred_fallthru
      _
    // Predicated region
    $region14: #{spectral_cnn_forward.1} parent=1 // pred_check
      _
    $region15: #{spectral_cnn_forward.1} parent=1 // pred_check_branch
      %27 = sbr.rel (0) target = $region17
    $region16: #{spectral_cnn_forward.1} parent=1 // pred_region
      _
    $region17: #{spectral_cnn_forward.1} parent=1 // pred_fallthru
      _
    // Predicated region
    $region18: #{spectral_cnn_forward.1} parent=1 // pred_check
      _
    $region19: #{spectral_cnn_forward.1} parent=1 // pred_check_branch
      %29 = sbr.rel (0) target = $region21
    $region20: #{spectral_cnn_forward.1} parent=1 // pred_region
      _
    $region21: #{spectral_cnn_forward.1} parent=1 // pred_fallthru
      _
    // Predicated region
    $region22: #{spectral_cnn_forward.1} parent=1 // pred_check
      _
    $region23: #{spectral_cnn_forward.1} parent=1 // pred_check_branch
      %31 = sbr.rel (0) target = $region25
    $region24: #{spectral_cnn_forward.1} parent=1 // pred_region
      %33 = vsyncadd [#allocation7], 0
      %s34 = sshll.u32 %s5, 4
      %s35 = int_to_ptr.hbm [resolvable:$true] %s34
      %s36 = sshll.u32 [#allocation6], 4
      %s37 = int_to_ptr.vmem [resolvable:$true] %s36
      %42 = dma.hbm_to_vmem [thread:$0]  %s35, 3072, %s37, [#allocation7], 128, 128, 8
    $region25: #{spectral_cnn_forward.1} parent=1 // pred_fallthru
      _
    // Predicated region
    $region26: #{spectral_cnn_forward.1} parent=1 // pred_check
      _
    $region27: #{spectral_cnn_forward.1} parent=1 // pred_check_branch
      %44 = sbr.rel (0) target = $region29
    $region28: #{spectral_cnn_forward.1} parent=1 // pred_region
      _
    $region29: #{spectral_cnn_forward.1} parent=1 // pred_fallthru
      _
    // Predicated region
    $region30: #{spectral_cnn_forward.1} parent=1 // pred_check
      _
    $region31: #{spectral_cnn_forward.1} parent=1 // pred_check_branch
      %46 = sbr.rel (0) target = $region33
    $region32: #{spectral_cnn_forward.1} parent=1 // pred_region
      %48 = vsyncadd [#allocation9], 0
      %s49 = sshll.u32 %s7, 4
      %s50 = int_to_ptr.hbm [resolvable:$true] %s49
      %s51 = sshll.u32 [#allocation8], 4
      %s52 = int_to_ptr.vmem [resolvable:$true] %s51
      %57 = dma.hbm_to_vmem [thread:$0]  %s50, 16384, %s52, [#allocation9], 128, 128, 8
    $region33: #{spectral_cnn_forward.1} parent=1 // pred_fallthru
      _
    // Predicated region
    $region34: #{spectral_cnn_forward.1} parent=1 // pred_check
      _
    $region35: #{spectral_cnn_forward.1} parent=1 // pred_check_branch
      %59 = sbr.rel (0) target = $region37
    $region36: #{spectral_cnn_forward.1} parent=1 // pred_region
      _
    $region37: #{spectral_cnn_forward.1} parent=1 // pred_fallthru
      _
    // Predicated region
    $region38: #{spectral_cnn_forward.1} parent=1 // pred_check
      _
    $region39: #{spectral_cnn_forward.1} parent=1 // pred_check_branch
      %61 = sbr.rel (0) target = $region41
    $region40: #{spectral_cnn_forward.1} parent=1 // pred_region
      _
    $region41: #{spectral_cnn_forward.1} parent=1 // pred_fallthru
      _
    // Predicated region
    $region42: #{spectral_cnn_forward.1} parent=1 // pred_check
      _
    $region43: #{spectral_cnn_forward.1} parent=1 // pred_check_branch
      %63 = sbr.rel (0) target = $region45
    $region44: #{spectral_cnn_forward.1} parent=1 // pred_region
      _
    $region45: #{spectral_cnn_forward.1} parent=1 // pred_fallthru
      _
    // Predicated region
    $region46: #{spectral_cnn_forward.1} parent=1 // pred_check
      _
    $region47: #{spectral_cnn_forward.1} parent=1 // pred_check_branch
      %65 = sbr.rel (0) target = $region49
    $region48: #{spectral_cnn_forward.1} parent=1 // pred_region
      %67 = dma.done [#allocation7], 3072
    $region49: #{spectral_cnn_forward.1} parent=1 // pred_fallthru
      _
    // Predicated region
    $region50: #{spectral_cnn_forward.1} parent=1 // pred_check
      _
    $region51: #{spectral_cnn_forward.1} parent=1 // pred_check_branch
      %69 = sbr.rel (0) target = $region53
    $region52: #{spectral_cnn_forward.1} parent=1 // pred_region
      %71 = dma.done [#allocation9], 16384
    $region53: #{spectral_cnn_forward.1} parent=1 // pred_fallthru
      _
    %vm72 = vcmask 261120
    %73 = vst.msk [vmem:[#allocation2] sm:$0xff] %vm72, 0.0
    %74 = vst.msk [vmem:[#allocation2 + $0x50] sm:$0xff] %vm72, 0.0
    %75 = vst.msk [vmem:[#allocation2 + $0x48] sm:$0xff] %vm72, 0.0
    %76 = vst.msk [vmem:[#allocation2 + $0x98] sm:$0xff] %vm72, 0.0
    %77 = vst.msk [vmem:[#allocation3] sm:$0xff] %vm72, 0.0
    %78 = vst.msk [vmem:[#allocation3 + $0x30] sm:$0xff] %vm72, 0.0
    %79 = vst.msk [vmem:[#allocation3 + $0x28] sm:$0xff] %vm72, 0.0
    %80 = vst.msk [vmem:[#allocation3 + $0x58] sm:$0xff] %vm72, 0.0
    %vm81 = vcmask 523264
    %82 = vst.msk [vmem:[#allocation4] sm:$0xff] %vm81, 0.0
    %83 = vst.msk [vmem:[#allocation4 + $0x20] sm:$0xff] %vm81, 0.0
    %84 = vst.msk [vmem:[#allocation4 + $0x18] sm:$0xff] %vm81, 0.0
    %85 = vst.msk [vmem:[#allocation4 + $0x38] sm:$0xff] %vm81, 0.0
    %v86 = vld [vmem:[%s0] sm:$0x3]
    %v87 = vperm.slane %v86, 0
    %v88 = vlaneseq
    %v89 = vshrl.u32 %v88, 7
    %91 = vset.pattern.permute.xlu0 %v89
    %92 = vperm.xlu0 %91, %v87
    %v93 = vpop.permute.xlu0 %92
    %v94 = vlaneseq
    %v95 = vshrl.u32 %v94, 7
    %v96 = vadd.s32 %v95, 8
    %97 = vset.pattern.permute.xlu0 %v96
    %98 = vperm.xlu0 %97, %v87
    %v99 = vpop.permute.xlu0 %98
    %v100 = vlaneseq
    %v101 = vshrl.u32 %v100, 7
    %v102 = vadd.s32 %v101, 16
    %103 = vset.pattern.permute.xlu0 %v102
    %104 = vperm.xlu0 %103, %v87
    %v105 = vpop.permute.xlu0 %104
    %v106 = vlaneseq
    %v107 = vshrl.u32 %v106, 7
    %v108 = vadd.s32 %v107, 24
    %109 = vset.pattern.permute.xlu0 %v108
    %110 = vperm.xlu0 %109, %v87
    %v111 = vpop.permute.xlu0 %110
    %v112 = vlaneseq
    %v113 = vshrl.u32 %v112, 7
    %v114 = vadd.s32 %v113, 32
    %115 = vset.pattern.permute.xlu0 %v114
    %116 = vperm.xlu0 %115, %v87
    %v117 = vpop.permute.xlu0 %116
    %v118 = vlaneseq
    %v119 = vshrl.u32 %v118, 7
    %v120 = vadd.s32 %v119, 40
    %121 = vset.pattern.permute.xlu0 %v120
    %122 = vperm.xlu0 %121, %v87
    %v123 = vpop.permute.xlu0 %122
    %v124 = vlaneseq
    %v125 = vshrl.u32 %v124, 7
    %v126 = vadd.s32 %v125, 48
    %127 = vset.pattern.permute.xlu0 %v126
    %128 = vperm.xlu0 %127, %v87
    %v129 = vpop.permute.xlu0 %128
    %v130 = vlaneseq
    %v131 = vshrl.u32 %v130, 7
    %v132 = vadd.s32 %v131, 56
    %133 = vset.pattern.permute.xlu0 %v132
    %134 = vperm.xlu0 %133, %v87
    %v135 = vpop.permute.xlu0 %134
    %v136 = vperm.slane %v86, 1
    %v137 = vlaneseq
    %v138 = vshrl.u32 %v137, 7
    %140 = vset.pattern.permute.xlu0 %v138
    %141 = vperm.xlu0 %140, %v136
    %v142 = vpop.permute.xlu0 %141
    %v143 = vlaneseq
    %v144 = vshrl.u32 %v143, 7
    %v145 = vadd.s32 %v144, 8
    %146 = vset.pattern.permute.xlu0 %v145
    %147 = vperm.xlu0 %146, %v136
    %v148 = vpop.permute.xlu0 %147
    %v149 = vlaneseq
    %v150 = vshrl.u32 %v149, 7
    %v151 = vadd.s32 %v150, 16
    %152 = vset.pattern.permute.xlu0 %v151
    %153 = vperm.xlu0 %152, %v136
    %v154 = vpop.permute.xlu0 %153
    %v155 = vlaneseq
    %v156 = vshrl.u32 %v155, 7
    %v157 = vadd.s32 %v156, 24
    %158 = vset.pattern.permute.xlu0 %v157
    %159 = vperm.xlu0 %158, %v136
    %v160 = vpop.permute.xlu0 %159
    %v161 = vlaneseq
    %v162 = vshrl.u32 %v161, 7
    %v163 = vadd.s32 %v162, 32
    %164 = vset.pattern.permute.xlu0 %v163
    %165 = vperm.xlu0 %164, %v136
    %v166 = vpop.permute.xlu0 %165
    %v167 = vlaneseq
    %v168 = vshrl.u32 %v167, 7
    %v169 = vadd.s32 %v168, 40
    %170 = vset.pattern.permute.xlu0 %v169
    %171 = vperm.xlu0 %170, %v136
    %v172 = vpop.permute.xlu0 %171
    %v173 = vlaneseq
    %v174 = vshrl.u32 %v173, 7
    %v175 = vadd.s32 %v174, 48
    %176 = vset.pattern.permute.xlu0 %v175
    %177 = vperm.xlu0 %176, %v136
    %v178 = vpop.permute.xlu0 %177
    %v179 = vlaneseq
    %v180 = vshrl.u32 %v179, 7
    %v181 = vadd.s32 %v180, 56
    %182 = vset.pattern.permute.xlu0 %v181
    %183 = vperm.xlu0 %182, %v136
    %v184 = vpop.permute.xlu0 %183
    %185 = vst.msk [vmem:[#allocation2 + $0x8] sm:$0xff] %vm72, %v93
    %186 = vst.msk [vmem:[#allocation2 + $0x10] sm:$0xff] %vm72, %v99
    %187 = vst.msk [vmem:[#allocation2 + $0x18] sm:$0xff] %vm72, %v105
    %188 = vst.msk [vmem:[#allocation2 + $0x20] sm:$0xff] %vm72, %v111
    %189 = vst.msk [vmem:[#allocation2 + $0x28] sm:$0xff] %vm72, %v117
    %190 = vst.msk [vmem:[#allocation2 + $0x30] sm:$0xff] %vm72, %v123
    %191 = vst.msk [vmem:[#allocation2 + $0x38] sm:$0xff] %vm72, %v129
    %192 = vst.msk [vmem:[#allocation2 + $0x40] sm:$0xff] %vm72, %v135
    %193 = vst.msk [vmem:[#allocation2 + $0x58] sm:$0xff] %vm72, %v142
    %194 = vst.msk [vmem:[#allocation2 + $0x60] sm:$0xff] %vm72, %v148
    %195 = vst.msk [vmem:[#allocation2 + $0x68] sm:$0xff] %vm72, %v154
    %196 = vst.msk [vmem:[#allocation2 + $0x70] sm:$0xff] %vm72, %v160
    %197 = vst.msk [vmem:[#allocation2 + $0x78] sm:$0xff] %vm72, %v166
    %198 = vst.msk [vmem:[#allocation2 + $0x80] sm:$0xff] %vm72, %v172
    %199 = vst.msk [vmem:[#allocation2 + $0x88] sm:$0xff] %vm72, %v178
    %200 = vst.msk [vmem:[#allocation2 + $0x90] sm:$0xff] %vm72, %v184
    %v201 = vld [vmem:[%s1] sm:$0x1f]
    %v202 = vld [vmem:[#allocation2 + $0x6] sm:$0xff]
    %v203 = vld [vmem:[#allocation2 + $0xe] sm:$0xff]
    %v204 = vld [vmem:[#allocation2 + $0x16] sm:$0xff]
    %v205 = vld [vmem:[#allocation2 + $0x1e] sm:$0xff]
    %v206 = vld [vmem:[#allocation2 + $0x26] sm:$0xff]
    %v207 = vld [vmem:[#allocation2 + $0x2e] sm:$0xff]
    %v208 = vld [vmem:[#allocation2 + $0x36] sm:$0xff]
    %v209 = vld [vmem:[#allocation2 + $0x3e] sm:$0xff]
    %v210 = vld [vmem:[#allocation2 + $0x56] sm:$0xff]
    %v211 = vld [vmem:[#allocation2 + $0x5e] sm:$0xff]
    %v212 = vld [vmem:[#allocation2 + $0x66] sm:$0xff]
    %v213 = vld [vmem:[#allocation2 + $0x6e] sm:$0xff]
    %v214 = vld [vmem:[#allocation2 + $0x76] sm:$0xff]
    %v215 = vld [vmem:[#allocation2 + $0x7e] sm:$0xff]
    %v216 = vld [vmem:[#allocation2 + $0x86] sm:$0xff]
    %v217 = vld [vmem:[#allocation2 + $0x8e] sm:$0xff]
    %v218 = vperm.slane %v201, 0
    %v219 = vmul.f32 %v202, %v218
    %v220 = vmul.f32 %v203, %v218
    %v221 = vmul.f32 %v204, %v218
    %v222 = vmul.f32 %v205, %v218
    %v223 = vmul.f32 %v206, %v218
    %v224 = vmul.f32 %v207, %v218
    %v225 = vmul.f32 %v208, %v218
    %v226 = vmul.f32 %v209, %v218
    %v227 = vmul.f32 %v210, %v218
    %v228 = vmul.f32 %v211, %v218
    %v229 = vmul.f32 %v212, %v218
    %v230 = vmul.f32 %v213, %v218
    %v231 = vmul.f32 %v214, %v218
    %v232 = vmul.f32 %v215, %v218
    %v233 = vmul.f32 %v216, %v218
    %v234 = vmul.f32 %v217, %v218
    %v235 = vadd.f32 %v219, 0.0
    %v236 = vadd.f32 %v220, 0.0
    %v237 = vadd.f32 %v221, 0.0
    %v238 = vadd.f32 %v222, 0.0
    %v239 = vadd.f32 %v223, 0.0
    %v240 = vadd.f32 %v224, 0.0
    %v241 = vadd.f32 %v225, 0.0
    %v242 = vadd.f32 %v226, 0.0
    %v243 = vadd.f32 %v227, 0.0
    %v244 = vadd.f32 %v228, 0.0
    %v245 = vadd.f32 %v229, 0.0
    %v246 = vadd.f32 %v230, 0.0
    %v247 = vadd.f32 %v231, 0.0
    %v248 = vadd.f32 %v232, 0.0
    %v249 = vadd.f32 %v233, 0.0
    %v250 = vadd.f32 %v234, 0.0
    %v251 = vld [vmem:[#allocation2 + $0x7] sm:$0xff]
    %v252 = vld [vmem:[#allocation2 + $0xf] sm:$0xff]
    %v253 = vld [vmem:[#allocation2 + $0x17] sm:$0xff]
    %v254 = vld [vmem:[#allocation2 + $0x1f] sm:$0xff]
    %v255 = vld [vmem:[#allocation2 + $0x27] sm:$0xff]
    %v256 = vld [vmem:[#allocation2 + $0x2f] sm:$0xff]
    %v257 = vld [vmem:[#allocation2 + $0x37] sm:$0xff]
    %v258 = vld [vmem:[#allocation2 + $0x3f] sm:$0xff]
    %v259 = vld [vmem:[#allocation2 + $0x57] sm:$0xff]
    %v260 = vld [vmem:[#allocation2 + $0x5f] sm:$0xff]
    %v261 = vld [vmem:[#allocation2 + $0x67] sm:$0xff]
    %v262 = vld [vmem:[#allocation2 + $0x6f] sm:$0xff]
    %v263 = vld [vmem:[#allocation2 + $0x77] sm:$0xff]
    %v264 = vld [vmem:[#allocation2 + $0x7f] sm:$0xff]
    %v265 = vld [vmem:[#allocation2 + $0x87] sm:$0xff]
    %v266 = vld [vmem:[#allocation2 + $0x8f] sm:$0xff]
    %v267 = vperm.slane %v201, 1
    %v268 = vmul.f32 %v251, %v267
    %v269 = vmul.f32 %v252, %v267
    %v270 = vmul.f32 %v253, %v267
    %v271 = vmul.f32 %v254, %v267
    %v272 = vmul.f32 %v255, %v267
    %v273 = vmul.f32 %v256, %v267
    %v274 = vmul.f32 %v257, %v267
    %v275 = vmul.f32 %v258, %v267
    %v276 = vmul.f32 %v259, %v267
    %v277 = vmul.f32 %v260, %v267
    %v278 = vmul.f32 %v261, %v267
    %v279 = vmul.f32 %v262, %v267
    %v280 = vmul.f32 %v263, %v267
    %v281 = vmul.f32 %v264, %v267
    %v282 = vmul.f32 %v265, %v267
    %v283 = vmul.f32 %v266, %v267
    %v284 = vadd.f32 %v235, %v268
    %v285 = vadd.f32 %v236, %v269
    %v286 = vadd.f32 %v237, %v270
    %v287 = vadd.f32 %v238, %v271
    %v288 = vadd.f32 %v239, %v272
    %v289 = vadd.f32 %v240, %v273
    %v290 = vadd.f32 %v241, %v274
    %v291 = vadd.f32 %v242, %v275
    %v292 = vadd.f32 %v243, %v276
    %v293 = vadd.f32 %v244, %v277
    %v294 = vadd.f32 %v245, %v278
    %v295 = vadd.f32 %v246, %v279
    %v296 = vadd.f32 %v247, %v280
    %v297 = vadd.f32 %v248, %v281
    %v298 = vadd.f32 %v249, %v282
    %v299 = vadd.f32 %v250, %v283
    %v300 = vld [vmem:[#allocation2 + $0x8] sm:$0xff]
    %v301 = vld [vmem:[#allocation2 + $0x10] sm:$0xff]
    %v302 = vld [vmem:[#allocation2 + $0x18] sm:$0xff]
    %v303 = vld [vmem:[#allocation2 + $0x20] sm:$0xff]
    %v304 = vld [vmem:[#allocation2 + $0x28] sm:$0xff]
    %v305 = vld [vmem:[#allocation2 + $0x30] sm:$0xff]
    %v306 = vld [vmem:[#allocation2 + $0x38] sm:$0xff]
    %v307 = vld [vmem:[#allocation2 + $0x40] sm:$0xff]
    %v308 = vld [vmem:[#allocation2 + $0x58] sm:$0xff]
    %v309 = vld [vmem:[#allocation2 + $0x60] sm:$0xff]
    %v310 = vld [vmem:[#allocation2 + $0x68] sm:$0xff]
    %v311 = vld [vmem:[#allocation2 + $0x70] sm:$0xff]
    %v312 = vld [vmem:[#allocation2 + $0x78] sm:$0xff]
    %v313 = vld [vmem:[#allocation2 + $0x80] sm:$0xff]
    %v314 = vld [vmem:[#allocation2 + $0x88] sm:$0xff]
    %v315 = vld [vmem:[#allocation2 + $0x90] sm:$0xff]
    %v316 = vperm.slane %v201, 2
    %v317 = vmul.f32 %v300, %v316
    %v318 = vmul.f32 %v301, %v316
    %v319 = vmul.f32 %v302, %v316
    %v320 = vmul.f32 %v303, %v316
    %v321 = vmul.f32 %v304, %v316
    %v322 = vmul.f32 %v305, %v316
    %v323 = vmul.f32 %v306, %v316
    %v324 = vmul.f32 %v307, %v316
    %v325 = vmul.f32 %v308, %v316
    %v326 = vmul.f32 %v309, %v316
    %v327 = vmul.f32 %v310, %v316
    %v328 = vmul.f32 %v311, %v316
    %v329 = vmul.f32 %v312, %v316
    %v330 = vmul.f32 %v313, %v316
    %v331 = vmul.f32 %v314, %v316
    %v332 = vmul.f32 %v315, %v316
    %v333 = vadd.f32 %v284, %v317
    %v334 = vadd.f32 %v285, %v318
    %v335 = vadd.f32 %v286, %v319
    %v336 = vadd.f32 %v287, %v320
    %v337 = vadd.f32 %v288, %v321
    %v338 = vadd.f32 %v289, %v322
    %v339 = vadd.f32 %v290, %v323
    %v340 = vadd.f32 %v291, %v324
    %v341 = vadd.f32 %v292, %v325
    %v342 = vadd.f32 %v293, %v326
    %v343 = vadd.f32 %v294, %v327
    %v344 = vadd.f32 %v295, %v328
    %v345 = vadd.f32 %v296, %v329
    %v346 = vadd.f32 %v297, %v330
    %v347 = vadd.f32 %v298, %v331
    %v348 = vadd.f32 %v299, %v332
    %v349 = vld [vmem:[#allocation2 + $0x9] sm:$0xff]
    %v350 = vld [vmem:[#allocation2 + $0x11] sm:$0xff]
    %v351 = vld [vmem:[#allocation2 + $0x19] sm:$0xff]
    %v352 = vld [vmem:[#allocation2 + $0x21] sm:$0xff]
    %v353 = vld [vmem:[#allocation2 + $0x29] sm:$0xff]
    %v354 = vld [vmem:[#allocation2 + $0x31] sm:$0xff]
    %v355 = vld [vmem:[#allocation2 + $0x39] sm:$0xff]
    %v356 = vld [vmem:[#allocation2 + $0x41] sm:$0xff]
    %v357 = vld [vmem:[#allocation2 + $0x59] sm:$0xff]
    %v358 = vld [vmem:[#allocation2 + $0x61] sm:$0xff]
    %v359 = vld [vmem:[#allocation2 + $0x69] sm:$0xff]
    %v360 = vld [vmem:[#allocation2 + $0x71] sm:$0xff]
    %v361 = vld [vmem:[#allocation2 + $0x79] sm:$0xff]
    %v362 = vld [vmem:[#allocation2 + $0x81] sm:$0xff]
    %v363 = vld [vmem:[#allocation2 + $0x89] sm:$0xff]
    %v364 = vld [vmem:[#allocation2 + $0x91] sm:$0xff]
    %v365 = vperm.slane %v201, 3
    %v366 = vmul.f32 %v349, %v365
    %v367 = vmul.f32 %v350, %v365
    %v368 = vmul.f32 %v351, %v365
    %v369 = vmul.f32 %v352, %v365
    %v370 = vmul.f32 %v353, %v365
    %v371 = vmul.f32 %v354, %v365
    %v372 = vmul.f32 %v355, %v365
    %v373 = vmul.f32 %v356, %v365
    %v374 = vmul.f32 %v357, %v365
    %v375 = vmul.f32 %v358, %v365
    %v376 = vmul.f32 %v359, %v365
    %v377 = vmul.f32 %v360, %v365
    %v378 = vmul.f32 %v361, %v365
    %v379 = vmul.f32 %v362, %v365
    %v380 = vmul.f32 %v363, %v365
    %v381 = vmul.f32 %v364, %v365
    %v382 = vadd.f32 %v333, %v366
    %v383 = vadd.f32 %v334, %v367
    %v384 = vadd.f32 %v335, %v368
    %v385 = vadd.f32 %v336, %v369
    %v386 = vadd.f32 %v337, %v370
    %v387 = vadd.f32 %v338, %v371
    %v388 = vadd.f32 %v339, %v372
    %v389 = vadd.f32 %v340, %v373
    %v390 = vadd.f32 %v341, %v374
    %v391 = vadd.f32 %v342, %v375
    %v392 = vadd.f32 %v343, %v376
    %v393 = vadd.f32 %v344, %v377
    %v394 = vadd.f32 %v345, %v378
    %v395 = vadd.f32 %v346, %v379
    %v396 = vadd.f32 %v347, %v380
    %v397 = vadd.f32 %v348, %v381
    %v398 = vld [vmem:[#allocation2 + $0xa] sm:$0xff]
    %v399 = vld [vmem:[#allocation2 + $0x12] sm:$0xff]
    %v400 = vld [vmem:[#allocation2 + $0x1a] sm:$0xff]
    %v401 = vld [vmem:[#allocation2 + $0x22] sm:$0xff]
    %v402 = vld [vmem:[#allocation2 + $0x2a] sm:$0xff]
    %v403 = vld [vmem:[#allocation2 + $0x32] sm:$0xff]
    %v404 = vld [vmem:[#allocation2 + $0x3a] sm:$0xff]
    %v405 = vld [vmem:[#allocation2 + $0x42] sm:$0xff]
    %v406 = vld [vmem:[#allocation2 + $0x5a] sm:$0xff]
    %v407 = vld [vmem:[#allocation2 + $0x62] sm:$0xff]
    %v408 = vld [vmem:[#allocation2 + $0x6a] sm:$0xff]
    %v409 = vld [vmem:[#allocation2 + $0x72] sm:$0xff]
    %v410 = vld [vmem:[#allocation2 + $0x7a] sm:$0xff]
    %v411 = vld [vmem:[#allocation2 + $0x82] sm:$0xff]
    %v412 = vld [vmem:[#allocation2 + $0x8a] sm:$0xff]
    %v413 = vld [vmem:[#allocation2 + $0x92] sm:$0xff]
    %v414 = vperm.slane %v201, 4
    %v415 = vmul.f32 %v398, %v414
    %v416 = vmul.f32 %v399, %v414
    %v417 = vmul.f32 %v400, %v414
    %v418 = vmul.f32 %v401, %v414
    %v419 = vmul.f32 %v402, %v414
    %v420 = vmul.f32 %v403, %v414
    %v421 = vmul.f32 %v404, %v414
    %v422 = vmul.f32 %v405, %v414
    %v423 = vmul.f32 %v406, %v414
    %v424 = vmul.f32 %v407, %v414
    %v425 = vmul.f32 %v408, %v414
    %v426 = vmul.f32 %v409, %v414
    %v427 = vmul.f32 %v410, %v414
    %v428 = vmul.f32 %v411, %v414
    %v429 = vmul.f32 %v412, %v414
    %v430 = vmul.f32 %v413, %v414
    %v431 = vadd.f32 %v382, %v415
    %v432 = vadd.f32 %v383, %v416
    %v433 = vadd.f32 %v384, %v417
    %v434 = vadd.f32 %v385, %v418
    %v435 = vadd.f32 %v386, %v419
    %v436 = vadd.f32 %v387, %v420
    %v437 = vadd.f32 %v388, %v421
    %v438 = vadd.f32 %v389, %v422
    %v439 = vadd.f32 %v390, %v423
    %v440 = vadd.f32 %v391, %v424
    %v441 = vadd.f32 %v392, %v425
    %v442 = vadd.f32 %v393, %v426
    %v443 = vadd.f32 %v394, %v427
    %v444 = vadd.f32 %v395, %v428
    %v445 = vadd.f32 %v396, %v429
    %v446 = vadd.f32 %v397, %v430
    %v447 = vld [vmem:[%s2] sm:$0x1]
    %v449 = vperm.slane %v447, 0
    %v451 = vadd.f32 %v431, %v449
    %v452 = vadd.f32 %v432, %v449
    %v453 = vadd.f32 %v433, %v449
    %v454 = vadd.f32 %v434, %v449
    %v455 = vadd.f32 %v435, %v449
    %v456 = vadd.f32 %v436, %v449
    %v457 = vadd.f32 %v437, %v449
    %v458 = vadd.f32 %v438, %v449
    %v459 = vadd.f32 %v439, %v449
    %v460 = vadd.f32 %v440, %v449
    %v461 = vadd.f32 %v441, %v449
    %v462 = vadd.f32 %v442, %v449
    %v463 = vadd.f32 %v443, %v449
    %v464 = vadd.f32 %v444, %v449
    %v465 = vadd.f32 %v445, %v449
    %v466 = vadd.f32 %v446, %v449
    %v467 = vmax.f32 %v451, 0.0
    %v468 = vmax.f32 %v452, 0.0
    %v469 = vmax.f32 %v453, 0.0
    %v470 = vmax.f32 %v454, 0.0
    %v471 = vmax.f32 %v455, 0.0
    %v472 = vmax.f32 %v456, 0.0
    %v473 = vmax.f32 %v457, 0.0
    %v474 = vmax.f32 %v458, 0.0
    %v475 = vmax.f32 %v459, 0.0
    %v476 = vmax.f32 %v460, 0.0
    %v477 = vmax.f32 %v461, 0.0
    %v478 = vmax.f32 %v462, 0.0
    %v479 = vmax.f32 %v463, 0.0
    %v480 = vmax.f32 %v464, 0.0
    %v481 = vmax.f32 %v465, 0.0
    %v482 = vmax.f32 %v466, 0.0
    %v499 = vrot.slane %v467, 2
    %v500 = vrot.slane %v467, 4
    %v501 = vrot.slane %v467, 6
    %v502 = vrot.slane %v468, 2
    %v503 = vrot.slane %v468, 4
    %v504 = vrot.slane %v468, 6
    %v505 = vrot.slane %v469, 2
    %v506 = vrot.slane %v469, 4
    %v507 = vrot.slane %v469, 6
    %v508 = vrot.slane %v470, 2
    %v509 = vrot.slane %v470, 4
    %v510 = vrot.slane %v470, 6
    %v511 = vrot.slane %v471, 2
    %v512 = vrot.slane %v471, 4
    %v513 = vrot.slane %v471, 6
    %v514 = vrot.slane %v472, 2
    %v515 = vrot.slane %v472, 4
    %v516 = vrot.slane %v472, 6
    %v517 = vrot.slane %v473, 2
    %v518 = vrot.slane %v473, 4
    %v519 = vrot.slane %v473, 6
    %v520 = vrot.slane %v474, 2
    %v521 = vrot.slane %v474, 4
    %v522 = vrot.slane %v474, 6
    %v523 = vrot.slane %v475, 2
    %v524 = vrot.slane %v475, 4
    %v525 = vrot.slane %v475, 6
    %v526 = vrot.slane %v476, 2
    %v527 = vrot.slane %v476, 4
    %v528 = vrot.slane %v476, 6
    %v529 = vrot.slane %v477, 2
    %v530 = vrot.slane %v477, 4
    %v531 = vrot.slane %v477, 6
    %v532 = vrot.slane %v478, 2
    %v533 = vrot.slane %v478, 4
    %v534 = vrot.slane %v478, 6
    %v535 = vrot.slane %v479, 2
    %v536 = vrot.slane %v479, 4
    %v537 = vrot.slane %v479, 6
    %v538 = vrot.slane %v480, 2
    %v539 = vrot.slane %v480, 4
    %v540 = vrot.slane %v480, 6
    %v541 = vrot.slane %v481, 2
    %v542 = vrot.slane %v481, 4
    %v543 = vrot.slane %v481, 6
    %v544 = vrot.slane %v482, 2
    %v545 = vrot.slane %v482, 4
    %v546 = vrot.slane %v482, 6
    %vm595 = vcmask 254976
    %v596 = vsel %vm595, %v467, -inf
    %v597 = vrot.slane %v596, 4
    %v598 = vmax.f32 %v596, %v597
    %v599 = vrot.slane %v598, 2
    %v600 = vmax.f32 %v598, %v599
    %v601 = vrot.slane %v600, 1
    %v602 = vmax.f32 %v600, %v601
    %v603 = vsel %vm595, %v499, -inf
    %v604 = vrot.slane %v603, 4
    %v605 = vmax.f32 %v603, %v604
    %v606 = vrot.slane %v605, 2
    %v607 = vmax.f32 %v605, %v606
    %v608 = vrot.slane %v607, 1
    %v609 = vmax.f32 %v607, %v608
    %v610 = vsel %vm595, %v500, -inf
    %v611 = vrot.slane %v610, 4
    %v612 = vmax.f32 %v610, %v611
    %v613 = vrot.slane %v612, 2
    %v614 = vmax.f32 %v612, %v613
    %v615 = vrot.slane %v614, 1
    %v616 = vmax.f32 %v614, %v615
    %v617 = vsel %vm595, %v501, -inf
    %v618 = vrot.slane %v617, 4
    %v619 = vmax.f32 %v617, %v618
    %v620 = vrot.slane %v619, 2
    %v621 = vmax.f32 %v619, %v620
    %v622 = vrot.slane %v621, 1
    %v623 = vmax.f32 %v621, %v622
    %v624 = vsel %vm595, %v468, -inf
    %v625 = vrot.slane %v624, 4
    %v626 = vmax.f32 %v624, %v625
    %v627 = vrot.slane %v626, 2
    %v628 = vmax.f32 %v626, %v627
    %v629 = vrot.slane %v628, 1
    %v630 = vmax.f32 %v628, %v629
    %v631 = vsel %vm595, %v502, -inf
    %v632 = vrot.slane %v631, 4
    %v633 = vmax.f32 %v631, %v632
    %v634 = vrot.slane %v633, 2
    %v635 = vmax.f32 %v633, %v634
    %v636 = vrot.slane %v635, 1
    %v637 = vmax.f32 %v635, %v636
    %v638 = vsel %vm595, %v503, -inf
    %v639 = vrot.slane %v638, 4
    %v640 = vmax.f32 %v638, %v639
    %v641 = vrot.slane %v640, 2
    %v642 = vmax.f32 %v640, %v641
    %v643 = vrot.slane %v642, 1
    %v644 = vmax.f32 %v642, %v643
    %v645 = vsel %vm595, %v504, -inf
    %v646 = vrot.slane %v645, 4
    %v647 = vmax.f32 %v645, %v646
    %v648 = vrot.slane %v647, 2
    %v649 = vmax.f32 %v647, %v648
    %v650 = vrot.slane %v649, 1
    %v651 = vmax.f32 %v649, %v650
    %v652 = vsel %vm595, %v469, -inf
    %v653 = vrot.slane %v652, 4
    %v654 = vmax.f32 %v652, %v653
    %v655 = vrot.slane %v654, 2
    %v656 = vmax.f32 %v654, %v655
    %v657 = vrot.slane %v656, 1
    %v658 = vmax.f32 %v656, %v657
    %v659 = vsel %vm595, %v505, -inf
    %v660 = vrot.slane %v659, 4
    %v661 = vmax.f32 %v659, %v660
    %v662 = vrot.slane %v661, 2
    %v663 = vmax.f32 %v661, %v662
    %v664 = vrot.slane %v663, 1
    %v665 = vmax.f32 %v663, %v664
    %v666 = vsel %vm595, %v506, -inf
    %v667 = vrot.slane %v666, 4
    %v668 = vmax.f32 %v666, %v667
    %v669 = vrot.slane %v668, 2
    %v670 = vmax.f32 %v668, %v669
    %v671 = vrot.slane %v670, 1
    %v672 = vmax.f32 %v670, %v671
    %v673 = vsel %vm595, %v507, -inf
    %v674 = vrot.slane %v673, 4
    %v675 = vmax.f32 %v673, %v674
    %v676 = vrot.slane %v675, 2
    %v677 = vmax.f32 %v675, %v676
    %v678 = vrot.slane %v677, 1
    %v679 = vmax.f32 %v677, %v678
    %v680 = vsel %vm595, %v470, -inf
    %v681 = vrot.slane %v680, 4
    %v682 = vmax.f32 %v680, %v681
    %v683 = vrot.slane %v682, 2
    %v684 = vmax.f32 %v682, %v683
    %v685 = vrot.slane %v684, 1
    %v686 = vmax.f32 %v684, %v685
    %v687 = vsel %vm595, %v508, -inf
    %v688 = vrot.slane %v687, 4
    %v689 = vmax.f32 %v687, %v688
    %v690 = vrot.slane %v689, 2
    %v691 = vmax.f32 %v689, %v690
    %v692 = vrot.slane %v691, 1
    %v693 = vmax.f32 %v691, %v692
    %v694 = vsel %vm595, %v509, -inf
    %v695 = vrot.slane %v694, 4
    %v696 = vmax.f32 %v694, %v695
    %v697 = vrot.slane %v696, 2
    %v698 = vmax.f32 %v696, %v697
    %v699 = vrot.slane %v698, 1
    %v700 = vmax.f32 %v698, %v699
    %v701 = vsel %vm595, %v510, -inf
    %v702 = vrot.slane %v701, 4
    %v703 = vmax.f32 %v701, %v702
    %v704 = vrot.slane %v703, 2
    %v705 = vmax.f32 %v703, %v704
    %v706 = vrot.slane %v705, 1
    %v707 = vmax.f32 %v705, %v706
    %v708 = vsel %vm595, %v471, -inf
    %v709 = vrot.slane %v708, 4
    %v710 = vmax.f32 %v708, %v709
    %v711 = vrot.slane %v710, 2
    %v712 = vmax.f32 %v710, %v711
    %v713 = vrot.slane %v712, 1
    %v714 = vmax.f32 %v712, %v713
    %v715 = vsel %vm595, %v511, -inf
    %v716 = vrot.slane %v715, 4
    %v717 = vmax.f32 %v715, %v716
    %v718 = vrot.slane %v717, 2
    %v719 = vmax.f32 %v717, %v718
    %v720 = vrot.slane %v719, 1
    %v721 = vmax.f32 %v719, %v720
    %v722 = vsel %vm595, %v512, -inf
    %v723 = vrot.slane %v722, 4
    %v724 = vmax.f32 %v722, %v723
    %v725 = vrot.slane %v724, 2
    %v726 = vmax.f32 %v724, %v725
    %v727 = vrot.slane %v726, 1
    %v728 = vmax.f32 %v726, %v727
    %v729 = vsel %vm595, %v513, -inf
    %v730 = vrot.slane %v729, 4
    %v731 = vmax.f32 %v729, %v730
    %v732 = vrot.slane %v731, 2
    %v733 = vmax.f32 %v731, %v732
    %v734 = vrot.slane %v733, 1
    %v735 = vmax.f32 %v733, %v734
    %v736 = vsel %vm595, %v472, -inf
    %v737 = vrot.slane %v736, 4
    %v738 = vmax.f32 %v736, %v737
    %v739 = vrot.slane %v738, 2
    %v740 = vmax.f32 %v738, %v739
    %v741 = vrot.slane %v740, 1
    %v742 = vmax.f32 %v740, %v741
    %v743 = vsel %vm595, %v514, -inf
    %v744 = vrot.slane %v743, 4
    %v745 = vmax.f32 %v743, %v744
    %v746 = vrot.slane %v745, 2
    %v747 = vmax.f32 %v745, %v746
    %v748 = vrot.slane %v747, 1
    %v749 = vmax.f32 %v747, %v748
    %v750 = vsel %vm595, %v515, -inf
    %v751 = vrot.slane %v750, 4
    %v752 = vmax.f32 %v750, %v751
    %v753 = vrot.slane %v752, 2
    %v754 = vmax.f32 %v752, %v753
    %v755 = vrot.slane %v754, 1
    %v756 = vmax.f32 %v754, %v755
    %v757 = vsel %vm595, %v516, -inf
    %v758 = vrot.slane %v757, 4
    %v759 = vmax.f32 %v757, %v758
    %v760 = vrot.slane %v759, 2
    %v761 = vmax.f32 %v759, %v760
    %v762 = vrot.slane %v761, 1
    %v763 = vmax.f32 %v761, %v762
    %v764 = vsel %vm595, %v473, -inf
    %v765 = vrot.slane %v764, 4
    %v766 = vmax.f32 %v764, %v765
    %v767 = vrot.slane %v766, 2
    %v768 = vmax.f32 %v766, %v767
    %v769 = vrot.slane %v768, 1
    %v770 = vmax.f32 %v768, %v769
    %v771 = vsel %vm595, %v517, -inf
    %v772 = vrot.slane %v771, 4
    %v773 = vmax.f32 %v771, %v772
    %v774 = vrot.slane %v773, 2
    %v775 = vmax.f32 %v773, %v774
    %v776 = vrot.slane %v775, 1
    %v777 = vmax.f32 %v775, %v776
    %v778 = vsel %vm595, %v518, -inf
    %v779 = vrot.slane %v778, 4
    %v780 = vmax.f32 %v778, %v779
    %v781 = vrot.slane %v780, 2
    %v782 = vmax.f32 %v780, %v781
    %v783 = vrot.slane %v782, 1
    %v784 = vmax.f32 %v782, %v783
    %v785 = vsel %vm595, %v519, -inf
    %v786 = vrot.slane %v785, 4
    %v787 = vmax.f32 %v785, %v786
    %v788 = vrot.slane %v787, 2
    %v789 = vmax.f32 %v787, %v788
    %v790 = vrot.slane %v789, 1
    %v791 = vmax.f32 %v789, %v790
    %v792 = vsel %vm595, %v474, -inf
    %v793 = vrot.slane %v792, 4
    %v794 = vmax.f32 %v792, %v793
    %v795 = vrot.slane %v794, 2
    %v796 = vmax.f32 %v794, %v795
    %v797 = vrot.slane %v796, 1
    %v798 = vmax.f32 %v796, %v797
    %v799 = vsel %vm595, %v520, -inf
    %v800 = vrot.slane %v799, 4
    %v801 = vmax.f32 %v799, %v800
    %v802 = vrot.slane %v801, 2
    %v803 = vmax.f32 %v801, %v802
    %v804 = vrot.slane %v803, 1
    %v805 = vmax.f32 %v803, %v804
    %v806 = vsel %vm595, %v521, -inf
    %v807 = vrot.slane %v806, 4
    %v808 = vmax.f32 %v806, %v807
    %v809 = vrot.slane %v808, 2
    %v810 = vmax.f32 %v808, %v809
    %v811 = vrot.slane %v810, 1
    %v812 = vmax.f32 %v810, %v811
    %v813 = vsel %vm595, %v522, -inf
    %v814 = vrot.slane %v813, 4
    %v815 = vmax.f32 %v813, %v814
    %v816 = vrot.slane %v815, 2
    %v817 = vmax.f32 %v815, %v816
    %v818 = vrot.slane %v817, 1
    %v819 = vmax.f32 %v817, %v818
    %v820 = vsel %vm595, %v475, -inf
    %v821 = vrot.slane %v820, 4
    %v822 = vmax.f32 %v820, %v821
    %v823 = vrot.slane %v822, 2
    %v824 = vmax.f32 %v822, %v823
    %v825 = vrot.slane %v824, 1
    %v826 = vmax.f32 %v824, %v825
    %v827 = vsel %vm595, %v523, -inf
    %v828 = vrot.slane %v827, 4
    %v829 = vmax.f32 %v827, %v828
    %v830 = vrot.slane %v829, 2
    %v831 = vmax.f32 %v829, %v830
    %v832 = vrot.slane %v831, 1
    %v833 = vmax.f32 %v831, %v832
    %v834 = vsel %vm595, %v524, -inf
    %v835 = vrot.slane %v834, 4
    %v836 = vmax.f32 %v834, %v835
    %v837 = vrot.slane %v836, 2
    %v838 = vmax.f32 %v836, %v837
    %v839 = vrot.slane %v838, 1
    %v840 = vmax.f32 %v838, %v839
    %v841 = vsel %vm595, %v525, -inf
    %v842 = vrot.slane %v841, 4
    %v843 = vmax.f32 %v841, %v842
    %v844 = vrot.slane %v843, 2
    %v845 = vmax.f32 %v843, %v844
    %v846 = vrot.slane %v845, 1
    %v847 = vmax.f32 %v845, %v846
    %v848 = vsel %vm595, %v476, -inf
    %v849 = vrot.slane %v848, 4
    %v850 = vmax.f32 %v848, %v849
    %v851 = vrot.slane %v850, 2
    %v852 = vmax.f32 %v850, %v851
    %v853 = vrot.slane %v852, 1
    %v854 = vmax.f32 %v852, %v853
    %v855 = vsel %vm595, %v526, -inf
    %v856 = vrot.slane %v855, 4
    %v857 = vmax.f32 %v855, %v856
    %v858 = vrot.slane %v857, 2
    %v859 = vmax.f32 %v857, %v858
    %v860 = vrot.slane %v859, 1
    %v861 = vmax.f32 %v859, %v860
    %v862 = vsel %vm595, %v527, -inf
    %v863 = vrot.slane %v862, 4
    %v864 = vmax.f32 %v862, %v863
    %v865 = vrot.slane %v864, 2
    %v866 = vmax.f32 %v864, %v865
    %v867 = vrot.slane %v866, 1
    %v868 = vmax.f32 %v866, %v867
    %v869 = vsel %vm595, %v528, -inf
    %v870 = vrot.slane %v869, 4
    %v871 = vmax.f32 %v869, %v870
    %v872 = vrot.slane %v871, 2
    %v873 = vmax.f32 %v871, %v872
    %v874 = vrot.slane %v873, 1
    %v875 = vmax.f32 %v873, %v874
    %v876 = vsel %vm595, %v477, -inf
    %v877 = vrot.slane %v876, 4
    %v878 = vmax.f32 %v876, %v877
    %v879 = vrot.slane %v878, 2
    %v880 = vmax.f32 %v878, %v879
    %v881 = vrot.slane %v880, 1
    %v882 = vmax.f32 %v880, %v881
    %v883 = vsel %vm595, %v529, -inf
    %v884 = vrot.slane %v883, 4
    %v885 = vmax.f32 %v883, %v884
    %v886 = vrot.slane %v885, 2
    %v887 = vmax.f32 %v885, %v886
    %v888 = vrot.slane %v887, 1
    %v889 = vmax.f32 %v887, %v888
    %v890 = vsel %vm595, %v530, -inf
    %v891 = vrot.slane %v890, 4
    %v892 = vmax.f32 %v890, %v891
    %v893 = vrot.slane %v892, 2
    %v894 = vmax.f32 %v892, %v893
    %v895 = vrot.slane %v894, 1
    %v896 = vmax.f32 %v894, %v895
    %v897 = vsel %vm595, %v531, -inf
    %v898 = vrot.slane %v897, 4
    %v899 = vmax.f32 %v897, %v898
    %v900 = vrot.slane %v899, 2
    %v901 = vmax.f32 %v899, %v900
    %v902 = vrot.slane %v901, 1
    %v903 = vmax.f32 %v901, %v902
    %v904 = vsel %vm595, %v478, -inf
    %v905 = vrot.slane %v904, 4
    %v906 = vmax.f32 %v904, %v905
    %v907 = vrot.slane %v906, 2
    %v908 = vmax.f32 %v906, %v907
    %v909 = vrot.slane %v908, 1
    %v910 = vmax.f32 %v908, %v909
    %v911 = vsel %vm595, %v532, -inf
    %v912 = vrot.slane %v911, 4
    %v913 = vmax.f32 %v911, %v912
    %v914 = vrot.slane %v913, 2
    %v915 = vmax.f32 %v913, %v914
    %v916 = vrot.slane %v915, 1
    %v917 = vmax.f32 %v915, %v916
    %v918 = vsel %vm595, %v533, -inf
    %v919 = vrot.slane %v918, 4
    %v920 = vmax.f32 %v918, %v919
    %v921 = vrot.slane %v920, 2
    %v922 = vmax.f32 %v920, %v921
    %v923 = vrot.slane %v922, 1
    %v924 = vmax.f32 %v922, %v923
    %v925 = vsel %vm595, %v534, -inf
    %v926 = vrot.slane %v925, 4
    %v927 = vmax.f32 %v925, %v926
    %v928 = vrot.slane %v927, 2
    %v929 = vmax.f32 %v927, %v928
    %v930 = vrot.slane %v929, 1
    %v931 = vmax.f32 %v929, %v930
    %v932 = vsel %vm595, %v479, -inf
    %v933 = vrot.slane %v932, 4
    %v934 = vmax.f32 %v932, %v933
    %v935 = vrot.slane %v934, 2
    %v936 = vmax.f32 %v934, %v935
    %v937 = vrot.slane %v936, 1
    %v938 = vmax.f32 %v936, %v937
    %v939 = vsel %vm595, %v535, -inf
    %v940 = vrot.slane %v939, 4
    %v941 = vmax.f32 %v939, %v940
    %v942 = vrot.slane %v941, 2
    %v943 = vmax.f32 %v941, %v942
    %v944 = vrot.slane %v943, 1
    %v945 = vmax.f32 %v943, %v944
    %v946 = vsel %vm595, %v536, -inf
    %v947 = vrot.slane %v946, 4
    %v948 = vmax.f32 %v946, %v947
    %v949 = vrot.slane %v948, 2
    %v950 = vmax.f32 %v948, %v949
    %v951 = vrot.slane %v950, 1
    %v952 = vmax.f32 %v950, %v951
    %v953 = vsel %vm595, %v537, -inf
    %v954 = vrot.slane %v953, 4
    %v955 = vmax.f32 %v953, %v954
    %v956 = vrot.slane %v955, 2
    %v957 = vmax.f32 %v955, %v956
    %v958 = vrot.slane %v957, 1
    %v959 = vmax.f32 %v957, %v958
    %v960 = vsel %vm595, %v480, -inf
    %v961 = vrot.slane %v960, 4
    %v962 = vmax.f32 %v960, %v961
    %v963 = vrot.slane %v962, 2
    %v964 = vmax.f32 %v962, %v963
    %v965 = vrot.slane %v964, 1
    %v966 = vmax.f32 %v964, %v965
    %v967 = vsel %vm595, %v538, -inf
    %v968 = vrot.slane %v967, 4
    %v969 = vmax.f32 %v967, %v968
    %v970 = vrot.slane %v969, 2
    %v971 = vmax.f32 %v969, %v970
    %v972 = vrot.slane %v971, 1
    %v973 = vmax.f32 %v971, %v972
    %v974 = vsel %vm595, %v539, -inf
    %v975 = vrot.slane %v974, 4
    %v976 = vmax.f32 %v974, %v975
    %v977 = vrot.slane %v976, 2
    %v978 = vmax.f32 %v976, %v977
    %v979 = vrot.slane %v978, 1
    %v980 = vmax.f32 %v978, %v979
    %v981 = vsel %vm595, %v540, -inf
    %v982 = vrot.slane %v981, 4
    %v983 = vmax.f32 %v981, %v982
    %v984 = vrot.slane %v983, 2
    %v985 = vmax.f32 %v983, %v984
    %v986 = vrot.slane %v985, 1
    %v987 = vmax.f32 %v985, %v986
    %v988 = vsel %vm595, %v481, -inf
    %v989 = vrot.slane %v988, 4
    %v990 = vmax.f32 %v988, %v989
    %v991 = vrot.slane %v990, 2
    %v992 = vmax.f32 %v990, %v991
    %v993 = vrot.slane %v992, 1
    %v994 = vmax.f32 %v992, %v993
    %v995 = vsel %vm595, %v541, -inf
    %v996 = vrot.slane %v995, 4
    %v997 = vmax.f32 %v995, %v996
    %v998 = vrot.slane %v997, 2
    %v999 = vmax.f32 %v997, %v998
    %v1000 = vrot.slane %v999, 1
    %v1001 = vmax.f32 %v999, %v1000
    %v1002 = vsel %vm595, %v542, -inf
    %v1003 = vrot.slane %v1002, 4
    %v1004 = vmax.f32 %v1002, %v1003
    %v1005 = vrot.slane %v1004, 2
    %v1006 = vmax.f32 %v1004, %v1005
    %v1007 = vrot.slane %v1006, 1
    %v1008 = vmax.f32 %v1006, %v1007
    %v1009 = vsel %vm595, %v543, -inf
    %v1010 = vrot.slane %v1009, 4
    %v1011 = vmax.f32 %v1009, %v1010
    %v1012 = vrot.slane %v1011, 2
    %v1013 = vmax.f32 %v1011, %v1012
    %v1014 = vrot.slane %v1013, 1
    %v1015 = vmax.f32 %v1013, %v1014
    %v1016 = vsel %vm595, %v482, -inf
    %v1017 = vrot.slane %v1016, 4
    %v1018 = vmax.f32 %v1016, %v1017
    %v1019 = vrot.slane %v1018, 2
    %v1020 = vmax.f32 %v1018, %v1019
    %v1021 = vrot.slane %v1020, 1
    %v1022 = vmax.f32 %v1020, %v1021
    %v1023 = vsel %vm595, %v544, -inf
    %v1024 = vrot.slane %v1023, 4
    %v1025 = vmax.f32 %v1023, %v1024
    %v1026 = vrot.slane %v1025, 2
    %v1027 = vmax.f32 %v1025, %v1026
    %v1028 = vrot.slane %v1027, 1
    %v1029 = vmax.f32 %v1027, %v1028
    %v1030 = vsel %vm595, %v545, -inf
    %v1031 = vrot.slane %v1030, 4
    %v1032 = vmax.f32 %v1030, %v1031
    %v1033 = vrot.slane %v1032, 2
    %v1034 = vmax.f32 %v1032, %v1033
    %v1035 = vrot.slane %v1034, 1
    %v1036 = vmax.f32 %v1034, %v1035
    %v1037 = vsel %vm595, %v546, -inf
    %v1038 = vrot.slane %v1037, 4
    %v1039 = vmax.f32 %v1037, %v1038
    %v1040 = vrot.slane %v1039, 2
    %v1041 = vmax.f32 %v1039, %v1040
    %v1042 = vrot.slane %v1041, 1
    %v1043 = vmax.f32 %v1041, %v1042
    %vm1108 = vcmask 1041409
    %v1109 = vsel %vm1108, %v609, %v602
    %vm1110 = vcmask 1042434
    %v1111 = vsel %vm1110, %v616, %v1109
    %vm1112 = vcmask 1043459
    %v1113 = vsel %vm1112, %v623, %v1111
    %vm1114 = vcmask 1044484
    %v1115 = vsel %vm1114, %v630, %v1113
    %vm1116 = vcmask 1045509
    %v1117 = vsel %vm1116, %v637, %v1115
    %vm1118 = vcmask 1046534
    %v1119 = vsel %vm1118, %v644, %v1117
    %vm1120 = vcmask 1047559
    %v1121 = vsel %vm1120, %v651, %v1119
    %v1122 = vsel %vm1108, %v665, %v658
    %v1123 = vsel %vm1110, %v672, %v1122
    %v1124 = vsel %vm1112, %v679, %v1123
    %v1125 = vsel %vm1114, %v686, %v1124
    %v1126 = vsel %vm1116, %v693, %v1125
    %v1127 = vsel %vm1118, %v700, %v1126
    %v1128 = vsel %vm1120, %v707, %v1127
    %v1129 = vsel %vm1108, %v721, %v714
    %v1130 = vsel %vm1110, %v728, %v1129
    %v1131 = vsel %vm1112, %v735, %v1130
    %v1132 = vsel %vm1114, %v742, %v1131
    %v1133 = vsel %vm1116, %v749, %v1132
    %v1134 = vsel %vm1118, %v756, %v1133
    %v1135 = vsel %vm1120, %v763, %v1134
    %v1136 = vsel %vm1108, %v777, %v770
    %v1137 = vsel %vm1110, %v784, %v1136
    %v1138 = vsel %vm1112, %v791, %v1137
    %v1139 = vsel %vm1114, %v798, %v1138
    %v1140 = vsel %vm1116, %v805, %v1139
    %v1141 = vsel %vm1118, %v812, %v1140
    %v1142 = vsel %vm1120, %v819, %v1141
    %v1143 = vsel %vm1108, %v833, %v826
    %v1144 = vsel %vm1110, %v840, %v1143
    %v1145 = vsel %vm1112, %v847, %v1144
    %v1146 = vsel %vm1114, %v854, %v1145
    %v1147 = vsel %vm1116, %v861, %v1146
    %v1148 = vsel %vm1118, %v868, %v1147
    %v1149 = vsel %vm1120, %v875, %v1148
    %v1150 = vsel %vm1108, %v889, %v882
    %v1151 = vsel %vm1110, %v896, %v1150
    %v1152 = vsel %vm1112, %v903, %v1151
    %v1153 = vsel %vm1114, %v910, %v1152
    %v1154 = vsel %vm1116, %v917, %v1153
    %v1155 = vsel %vm1118, %v924, %v1154
    %v1156 = vsel %vm1120, %v931, %v1155
    %v1157 = vsel %vm1108, %v945, %v938
    %v1158 = vsel %vm1110, %v952, %v1157
    %v1159 = vsel %vm1112, %v959, %v1158
    %v1160 = vsel %vm1114, %v966, %v1159
    %v1161 = vsel %vm1116, %v973, %v1160
    %v1162 = vsel %vm1118, %v980, %v1161
    %v1163 = vsel %vm1120, %v987, %v1162
    %v1164 = vsel %vm1108, %v1001, %v994
    %v1165 = vsel %vm1110, %v1008, %v1164
    %v1166 = vsel %vm1112, %v1015, %v1165
    %v1167 = vsel %vm1114, %v1022, %v1166
    %v1168 = vsel %vm1116, %v1029, %v1167
    %v1169 = vsel %vm1118, %v1036, %v1168
    %v1170 = vsel %vm1120, %v1043, %v1169
    %1179 = vst.msk [vmem:[#allocation3 + $0x8] sm:$0xff] %vm72, %v1121
    %1180 = vst.msk [vmem:[#allocation3 + $0x10] sm:$0xff] %vm72, %v1128
    %1181 = vst.msk [vmem:[#allocation3 + $0x18] sm:$0xff] %vm72, %v1135
    %1182 = vst.msk [vmem:[#allocation3 + $0x20] sm:$0xff] %vm72, %v1142
    %1183 = vst.msk [vmem:[#allocation3 + $0x38] sm:$0xff] %vm72, %v1149
    %1184 = vst.msk [vmem:[#allocation3 + $0x40] sm:$0xff] %vm72, %v1156
    %1185 = vst.msk [vmem:[#allocation3 + $0x48] sm:$0xff] %vm72, %v1163
    %1186 = vst.msk [vmem:[#allocation3 + $0x50] sm:$0xff] %vm72, %v1170
    %v1187 = vld [vmem:[#allocation3 + $0x7] sm:$0xff]
    %v1188 = vld [vmem:[#allocation3 + $0xf] sm:$0xff]
    %v1189 = vld [vmem:[#allocation3 + $0x17] sm:$0xff]
    %v1190 = vld [vmem:[#allocation3 + $0x1f] sm:$0xff]
    %v1191 = vld [vmem:[#allocation3 + $0x37] sm:$0xff]
    %v1192 = vld [vmem:[#allocation3 + $0x3f] sm:$0xff]
    %v1193 = vld [vmem:[#allocation3 + $0x47] sm:$0xff]
    %v1194 = vld [vmem:[#allocation3 + $0x4f] sm:$0xff]
    %v1195 = vld [vmem:[#allocation3 + $0x8] sm:$0xff]
    %v1196 = vld [vmem:[#allocation3 + $0x10] sm:$0xff]
    %v1197 = vld [vmem:[#allocation3 + $0x18] sm:$0xff]
    %v1198 = vld [vmem:[#allocation3 + $0x20] sm:$0xff]
    %v1199 = vld [vmem:[#allocation3 + $0x38] sm:$0xff]
    %v1200 = vld [vmem:[#allocation3 + $0x40] sm:$0xff]
    %v1201 = vld [vmem:[#allocation3 + $0x48] sm:$0xff]
    %v1202 = vld [vmem:[#allocation3 + $0x50] sm:$0xff]
    %v1203 = vld [vmem:[#allocation3 + $0x9] sm:$0xff]
    %v1204 = vld [vmem:[#allocation3 + $0x11] sm:$0xff]
    %v1205 = vld [vmem:[#allocation3 + $0x19] sm:$0xff]
    %v1206 = vld [vmem:[#allocation3 + $0x21] sm:$0xff]
    %v1207 = vld [vmem:[#allocation3 + $0x39] sm:$0xff]
    %v1208 = vld [vmem:[#allocation3 + $0x41] sm:$0xff]
    %v1209 = vld [vmem:[#allocation3 + $0x49] sm:$0xff]
    %v1210 = vld [vmem:[#allocation3 + $0x51] sm:$0xff]
    %1219 = vrot.lane.b32.xlu0 %v1195, 32
    %v1220 = vpop.permute.xlu0 %1219
    %1221 = vrot.lane.b32.xlu0 %v1196, 32
    %v1222 = vpop.permute.xlu0 %1221
    %1223 = vrot.lane.b32.xlu0 %v1197, 32
    %v1224 = vpop.permute.xlu0 %1223
    %1225 = vrot.lane.b32.xlu0 %v1198, 32
    %v1226 = vpop.permute.xlu0 %1225
    %1227 = vrot.lane.b32.xlu0 %v1199, 32
    %v1228 = vpop.permute.xlu0 %1227
    %1229 = vrot.lane.b32.xlu0 %v1200, 32
    %v1230 = vpop.permute.xlu0 %1229
    %1231 = vrot.lane.b32.xlu0 %v1201, 32
    %v1232 = vpop.permute.xlu0 %1231
    %1233 = vrot.lane.b32.xlu0 %v1202, 32
    %v1234 = vpop.permute.xlu0 %1233
    %1251 = vrot.lane.b32.xlu0 %v1203, 64
    %v1252 = vpop.permute.xlu0 %1251
    %1253 = vrot.lane.b32.xlu0 %v1204, 64
    %v1254 = vpop.permute.xlu0 %1253
    %1255 = vrot.lane.b32.xlu0 %v1205, 64
    %v1256 = vpop.permute.xlu0 %1255
    %1257 = vrot.lane.b32.xlu0 %v1206, 64
    %v1258 = vpop.permute.xlu0 %1257
    %1259 = vrot.lane.b32.xlu0 %v1207, 64
    %v1260 = vpop.permute.xlu0 %1259
    %1261 = vrot.lane.b32.xlu0 %v1208, 64
    %v1262 = vpop.permute.xlu0 %1261
    %1263 = vrot.lane.b32.xlu0 %v1209, 64
    %v1264 = vpop.permute.xlu0 %1263
    %1265 = vrot.lane.b32.xlu0 %v1210, 64
    %v1266 = vpop.permute.xlu0 %1265
    %v1275 = vsel %vm72, %v1187, %v1220
    %v1276 = vsel %vm72, %v1188, %v1222
    %v1277 = vsel %vm72, %v1189, %v1224
    %v1278 = vsel %vm72, %v1190, %v1226
    %v1279 = vsel %vm72, %v1191, %v1228
    %v1280 = vsel %vm72, %v1192, %v1230
    %v1281 = vsel %vm72, %v1193, %v1232
    %v1282 = vsel %vm72, %v1194, %v1234
    %v1283 = vsel %vm81, %v1275, %v1252
    %v1284 = vsel %vm81, %v1276, %v1254
    %v1285 = vsel %vm81, %v1277, %v1256
    %v1286 = vsel %vm81, %v1278, %v1258
    %v1287 = vsel %vm81, %v1279, %v1260
    %v1288 = vsel %vm81, %v1280, %v1262
    %v1289 = vsel %vm81, %v1281, %v1264
    %v1290 = vsel %vm81, %v1282, %v1266
    %v1291 = vld [vmem:[%s3] sm:$0xff]
    %v1292 = vld [vmem:[%s3 + $0x8] sm:$0xff]
    %v1293 = vld [vmem:[%s3 + $0x10] sm:$0xff]
    %v1294 = vld [vmem:[%s3 + $0x18] sm:$0xff]
    %v1295 = vld [vmem:[%s3 + $0x20] sm:$0xff]
    %v1296 = vld [vmem:[%s3 + $0x28] sm:$0xff]
    %v1297 = vld [vmem:[%s3 + $0x30] sm:$0xff]
    %v1298 = vld [vmem:[%s3 + $0x38] sm:$0xff]
    %v1299 = vld [vmem:[%s3 + $0x40] sm:$0xff]
    %v1300 = vld [vmem:[%s3 + $0x48] sm:$0xff]
    %v1301 = vld [vmem:[%s3 + $0x50] sm:$0xff]
    %v1302 = vld [vmem:[%s3 + $0x58] sm:$0xff]
    %v1303 = vld [vmem:[%s4] sm:$0x1]
    %v1305 = vperm.slane %v1303, 0
    %vm1307 = vcmask 785408
    %v1309 = vsel %vm1307, %v1283, 0
    %v1312 = vsel %vm1307, %v1284, 0
    %v1315 = vsel %vm1307, %v1285, 0
    %v1318 = vsel %vm1307, %v1286, 0
    %v1321 = vsel %vm1307, %v1287, 0
    %v1324 = vsel %vm1307, %v1288, 0
    %v1327 = vsel %vm1307, %v1289, 0
    %v1330 = vsel %vm1307, %v1290, 0
    %1332 = vmatpush.msra.mxu0 0.0
    %1333 = vmatpush.msra.mxu0 0.0
    %1334 = vmatpush.msra.mxu0 0.0
    %1335 = vmatpush.msra.mxu0 0.0
    %1336 = vmatpush.msra.mxu0 %v1302
    %1337 = vmatpush.msra.mxu0 %v1301
    %1338 = vmatpush.msra.mxu0 %v1300
    %1339 = vmatpush.msra.mxu0 %v1299
    %1340 = vmatpush.msra.mxu0 %v1298
    %1341 = vmatpush.msra.mxu0 %v1297
    %1342 = vmatpush.msra.mxu0 %v1296
    %1343 = vmatpush.msra.mxu0 %v1295
    %1344 = vmatpush.msra.mxu0 %v1294
    %1345 = vmatpush.msra.mxu0 %v1293
    %1346 = vmatpush.msra.mxu0 %v1292
    %1347 = vmatpush.msra.mxu0 %v1291
    %1348 = vmatmul.f32.gmra.mxu0 %v1309
    %v1349 = vpop.f32.mrf.mxu0
    %v1350 = vadd.f32 %v1305, %v1349
    %1351 = vmatmul.f32.gmra.mxu0 %v1312
    %v1352 = vpop.f32.mrf.mxu0
    %v1353 = vadd.f32 %v1305, %v1352
    %1354 = vmatmul.f32.gmra.mxu0 %v1315
    %v1355 = vpop.f32.mrf.mxu0
    %v1356 = vadd.f32 %v1305, %v1355
    %1357 = vmatmul.f32.gmra.mxu0 %v1318
    %v1358 = vpop.f32.mrf.mxu0
    %v1359 = vadd.f32 %v1305, %v1358
    %1360 = vmatmul.f32.gmra.mxu0 %v1321
    %v1361 = vpop.f32.mrf.mxu0
    %v1362 = vadd.f32 %v1305, %v1361
    %1363 = vmatmul.f32.gmra.mxu0 %v1324
    %v1364 = vpop.f32.mrf.mxu0
    %v1365 = vadd.f32 %v1305, %v1364
    %1366 = vmatmul.f32.gmra.mxu0 %v1327
    %v1367 = vpop.f32.mrf.mxu0
    %v1368 = vadd.f32 %v1305, %v1367
    %1369 = vmatmul.f32.gmra.mxu0 %v1330
    %v1370 = vpop.f32.mrf.mxu0
    %v1371 = vadd.f32 %v1305, %v1370
    %1372 = vdwg.mxu0
    %v1373 = vmax.f32 %v1350, 0.0
    %v1374 = vmax.f32 %v1353, 0.0
    %v1375 = vmax.f32 %v1356, 0.0
    %v1376 = vmax.f32 %v1359, 0.0
    %v1377 = vmax.f32 %v1362, 0.0
    %v1378 = vmax.f32 %v1365, 0.0
    %v1379 = vmax.f32 %v1368, 0.0
    %v1380 = vmax.f32 %v1371, 0.0
    %v1389 = vrot.slane %v1373, 2
    %v1390 = vrot.slane %v1373, 4
    %v1391 = vrot.slane %v1373, 6
    %v1392 = vrot.slane %v1374, 2
    %v1393 = vrot.slane %v1374, 4
    %v1394 = vrot.slane %v1374, 6
    %v1395 = vrot.slane %v1375, 2
    %v1396 = vrot.slane %v1375, 4
    %v1397 = vrot.slane %v1375, 6
    %v1398 = vrot.slane %v1376, 2
    %v1399 = vrot.slane %v1376, 4
    %v1400 = vrot.slane %v1376, 6
    %v1401 = vrot.slane %v1377, 2
    %v1402 = vrot.slane %v1377, 4
    %v1403 = vrot.slane %v1377, 6
    %v1404 = vrot.slane %v1378, 2
    %v1405 = vrot.slane %v1378, 4
    %v1406 = vrot.slane %v1378, 6
    %v1407 = vrot.slane %v1379, 2
    %v1408 = vrot.slane %v1379, 4
    %v1409 = vrot.slane %v1379, 6
    %v1410 = vrot.slane %v1380, 2
    %v1411 = vrot.slane %v1380, 4
    %v1412 = vrot.slane %v1380, 6
    %vm1437 = vcmask 517120
    %v1438 = vsel %vm1437, %v1373, -inf
    %v1439 = vrot.slane %v1438, 4
    %v1440 = vmax.f32 %v1438, %v1439
    %v1441 = vrot.slane %v1440, 2
    %v1442 = vmax.f32 %v1440, %v1441
    %v1443 = vrot.slane %v1442, 1
    %v1444 = vmax.f32 %v1442, %v1443
    %v1445 = vsel %vm1437, %v1389, -inf
    %v1446 = vrot.slane %v1445, 4
    %v1447 = vmax.f32 %v1445, %v1446
    %v1448 = vrot.slane %v1447, 2
    %v1449 = vmax.f32 %v1447, %v1448
    %v1450 = vrot.slane %v1449, 1
    %v1451 = vmax.f32 %v1449, %v1450
    %v1452 = vsel %vm1437, %v1390, -inf
    %v1453 = vrot.slane %v1452, 4
    %v1454 = vmax.f32 %v1452, %v1453
    %v1455 = vrot.slane %v1454, 2
    %v1456 = vmax.f32 %v1454, %v1455
    %v1457 = vrot.slane %v1456, 1
    %v1458 = vmax.f32 %v1456, %v1457
    %v1459 = vsel %vm1437, %v1391, -inf
    %v1460 = vrot.slane %v1459, 4
    %v1461 = vmax.f32 %v1459, %v1460
    %v1462 = vrot.slane %v1461, 2
    %v1463 = vmax.f32 %v1461, %v1462
    %v1464 = vrot.slane %v1463, 1
    %v1465 = vmax.f32 %v1463, %v1464
    %v1466 = vsel %vm1437, %v1374, -inf
    %v1467 = vrot.slane %v1466, 4
    %v1468 = vmax.f32 %v1466, %v1467
    %v1469 = vrot.slane %v1468, 2
    %v1470 = vmax.f32 %v1468, %v1469
    %v1471 = vrot.slane %v1470, 1
    %v1472 = vmax.f32 %v1470, %v1471
    %v1473 = vsel %vm1437, %v1392, -inf
    %v1474 = vrot.slane %v1473, 4
    %v1475 = vmax.f32 %v1473, %v1474
    %v1476 = vrot.slane %v1475, 2
    %v1477 = vmax.f32 %v1475, %v1476
    %v1478 = vrot.slane %v1477, 1
    %v1479 = vmax.f32 %v1477, %v1478
    %v1480 = vsel %vm1437, %v1393, -inf
    %v1481 = vrot.slane %v1480, 4
    %v1482 = vmax.f32 %v1480, %v1481
    %v1483 = vrot.slane %v1482, 2
    %v1484 = vmax.f32 %v1482, %v1483
    %v1485 = vrot.slane %v1484, 1
    %v1486 = vmax.f32 %v1484, %v1485
    %v1487 = vsel %vm1437, %v1394, -inf
    %v1488 = vrot.slane %v1487, 4
    %v1489 = vmax.f32 %v1487, %v1488
    %v1490 = vrot.slane %v1489, 2
    %v1491 = vmax.f32 %v1489, %v1490
    %v1492 = vrot.slane %v1491, 1
    %v1493 = vmax.f32 %v1491, %v1492
    %v1494 = vsel %vm1437, %v1375, -inf
    %v1495 = vrot.slane %v1494, 4
    %v1496 = vmax.f32 %v1494, %v1495
    %v1497 = vrot.slane %v1496, 2
    %v1498 = vmax.f32 %v1496, %v1497
    %v1499 = vrot.slane %v1498, 1
    %v1500 = vmax.f32 %v1498, %v1499
    %v1501 = vsel %vm1437, %v1395, -inf
    %v1502 = vrot.slane %v1501, 4
    %v1503 = vmax.f32 %v1501, %v1502
    %v1504 = vrot.slane %v1503, 2
    %v1505 = vmax.f32 %v1503, %v1504
    %v1506 = vrot.slane %v1505, 1
    %v1507 = vmax.f32 %v1505, %v1506
    %v1508 = vsel %vm1437, %v1396, -inf
    %v1509 = vrot.slane %v1508, 4
    %v1510 = vmax.f32 %v1508, %v1509
    %v1511 = vrot.slane %v1510, 2
    %v1512 = vmax.f32 %v1510, %v1511
    %v1513 = vrot.slane %v1512, 1
    %v1514 = vmax.f32 %v1512, %v1513
    %v1515 = vsel %vm1437, %v1397, -inf
    %v1516 = vrot.slane %v1515, 4
    %v1517 = vmax.f32 %v1515, %v1516
    %v1518 = vrot.slane %v1517, 2
    %v1519 = vmax.f32 %v1517, %v1518
    %v1520 = vrot.slane %v1519, 1
    %v1521 = vmax.f32 %v1519, %v1520
    %v1522 = vsel %vm1437, %v1376, -inf
    %v1523 = vrot.slane %v1522, 4
    %v1524 = vmax.f32 %v1522, %v1523
    %v1525 = vrot.slane %v1524, 2
    %v1526 = vmax.f32 %v1524, %v1525
    %v1527 = vrot.slane %v1526, 1
    %v1528 = vmax.f32 %v1526, %v1527
    %v1529 = vsel %vm1437, %v1398, -inf
    %v1530 = vrot.slane %v1529, 4
    %v1531 = vmax.f32 %v1529, %v1530
    %v1532 = vrot.slane %v1531, 2
    %v1533 = vmax.f32 %v1531, %v1532
    %v1534 = vrot.slane %v1533, 1
    %v1535 = vmax.f32 %v1533, %v1534
    %v1536 = vsel %vm1437, %v1399, -inf
    %v1537 = vrot.slane %v1536, 4
    %v1538 = vmax.f32 %v1536, %v1537
    %v1539 = vrot.slane %v1538, 2
    %v1540 = vmax.f32 %v1538, %v1539
    %v1541 = vrot.slane %v1540, 1
    %v1542 = vmax.f32 %v1540, %v1541
    %v1543 = vsel %vm1437, %v1400, -inf
    %v1544 = vrot.slane %v1543, 4
    %v1545 = vmax.f32 %v1543, %v1544
    %v1546 = vrot.slane %v1545, 2
    %v1547 = vmax.f32 %v1545, %v1546
    %v1548 = vrot.slane %v1547, 1
    %v1549 = vmax.f32 %v1547, %v1548
    %v1550 = vsel %vm1437, %v1377, -inf
    %v1551 = vrot.slane %v1550, 4
    %v1552 = vmax.f32 %v1550, %v1551
    %v1553 = vrot.slane %v1552, 2
    %v1554 = vmax.f32 %v1552, %v1553
    %v1555 = vrot.slane %v1554, 1
    %v1556 = vmax.f32 %v1554, %v1555
    %v1557 = vsel %vm1437, %v1401, -inf
    %v1558 = vrot.slane %v1557, 4
    %v1559 = vmax.f32 %v1557, %v1558
    %v1560 = vrot.slane %v1559, 2
    %v1561 = vmax.f32 %v1559, %v1560
    %v1562 = vrot.slane %v1561, 1
    %v1563 = vmax.f32 %v1561, %v1562
    %v1564 = vsel %vm1437, %v1402, -inf
    %v1565 = vrot.slane %v1564, 4
    %v1566 = vmax.f32 %v1564, %v1565
    %v1567 = vrot.slane %v1566, 2
    %v1568 = vmax.f32 %v1566, %v1567
    %v1569 = vrot.slane %v1568, 1
    %v1570 = vmax.f32 %v1568, %v1569
    %v1571 = vsel %vm1437, %v1403, -inf
    %v1572 = vrot.slane %v1571, 4
    %v1573 = vmax.f32 %v1571, %v1572
    %v1574 = vrot.slane %v1573, 2
    %v1575 = vmax.f32 %v1573, %v1574
    %v1576 = vrot.slane %v1575, 1
    %v1577 = vmax.f32 %v1575, %v1576
    %v1578 = vsel %vm1437, %v1378, -inf
    %v1579 = vrot.slane %v1578, 4
    %v1580 = vmax.f32 %v1578, %v1579
    %v1581 = vrot.slane %v1580, 2
    %v1582 = vmax.f32 %v1580, %v1581
    %v1583 = vrot.slane %v1582, 1
    %v1584 = vmax.f32 %v1582, %v1583
    %v1585 = vsel %vm1437, %v1404, -inf
    %v1586 = vrot.slane %v1585, 4
    %v1587 = vmax.f32 %v1585, %v1586
    %v1588 = vrot.slane %v1587, 2
    %v1589 = vmax.f32 %v1587, %v1588
    %v1590 = vrot.slane %v1589, 1
    %v1591 = vmax.f32 %v1589, %v1590
    %v1592 = vsel %vm1437, %v1405, -inf
    %v1593 = vrot.slane %v1592, 4
    %v1594 = vmax.f32 %v1592, %v1593
    %v1595 = vrot.slane %v1594, 2
    %v1596 = vmax.f32 %v1594, %v1595
    %v1597 = vrot.slane %v1596, 1
    %v1598 = vmax.f32 %v1596, %v1597
    %v1599 = vsel %vm1437, %v1406, -inf
    %v1600 = vrot.slane %v1599, 4
    %v1601 = vmax.f32 %v1599, %v1600
    %v1602 = vrot.slane %v1601, 2
    %v1603 = vmax.f32 %v1601, %v1602
    %v1604 = vrot.slane %v1603, 1
    %v1605 = vmax.f32 %v1603, %v1604
    %v1606 = vsel %vm1437, %v1379, -inf
    %v1607 = vrot.slane %v1606, 4
    %v1608 = vmax.f32 %v1606, %v1607
    %v1609 = vrot.slane %v1608, 2
    %v1610 = vmax.f32 %v1608, %v1609
    %v1611 = vrot.slane %v1610, 1
    %v1612 = vmax.f32 %v1610, %v1611
    %v1613 = vsel %vm1437, %v1407, -inf
    %v1614 = vrot.slane %v1613, 4
    %v1615 = vmax.f32 %v1613, %v1614
    %v1616 = vrot.slane %v1615, 2
    %v1617 = vmax.f32 %v1615, %v1616
    %v1618 = vrot.slane %v1617, 1
    %v1619 = vmax.f32 %v1617, %v1618
    %v1620 = vsel %vm1437, %v1408, -inf
    %v1621 = vrot.slane %v1620, 4
    %v1622 = vmax.f32 %v1620, %v1621
    %v1623 = vrot.slane %v1622, 2
    %v1624 = vmax.f32 %v1622, %v1623
    %v1625 = vrot.slane %v1624, 1
    %v1626 = vmax.f32 %v1624, %v1625
    %v1627 = vsel %vm1437, %v1409, -inf
    %v1628 = vrot.slane %v1627, 4
    %v1629 = vmax.f32 %v1627, %v1628
    %v1630 = vrot.slane %v1629, 2
    %v1631 = vmax.f32 %v1629, %v1630
    %v1632 = vrot.slane %v1631, 1
    %v1633 = vmax.f32 %v1631, %v1632
    %v1634 = vsel %vm1437, %v1380, -inf
    %v1635 = vrot.slane %v1634, 4
    %v1636 = vmax.f32 %v1634, %v1635
    %v1637 = vrot.slane %v1636, 2
    %v1638 = vmax.f32 %v1636, %v1637
    %v1639 = vrot.slane %v1638, 1
    %v1640 = vmax.f32 %v1638, %v1639
    %v1641 = vsel %vm1437, %v1410, -inf
    %v1642 = vrot.slane %v1641, 4
    %v1643 = vmax.f32 %v1641, %v1642
    %v1644 = vrot.slane %v1643, 2
    %v1645 = vmax.f32 %v1643, %v1644
    %v1646 = vrot.slane %v1645, 1
    %v1647 = vmax.f32 %v1645, %v1646
    %v1648 = vsel %vm1437, %v1411, -inf
    %v1649 = vrot.slane %v1648, 4
    %v1650 = vmax.f32 %v1648, %v1649
    %v1651 = vrot.slane %v1650, 2
    %v1652 = vmax.f32 %v1650, %v1651
    %v1653 = vrot.slane %v1652, 1
    %v1654 = vmax.f32 %v1652, %v1653
    %v1655 = vsel %vm1437, %v1412, -inf
    %v1656 = vrot.slane %v1655, 4
    %v1657 = vmax.f32 %v1655, %v1656
    %v1658 = vrot.slane %v1657, 2
    %v1659 = vmax.f32 %v1657, %v1658
    %v1660 = vrot.slane %v1659, 1
    %v1661 = vmax.f32 %v1659, %v1660
    %v1694 = vsel %vm1108, %v1451, %v1444
    %v1695 = vsel %vm1110, %v1458, %v1694
    %v1696 = vsel %vm1112, %v1465, %v1695
    %v1697 = vsel %vm1114, %v1472, %v1696
    %v1698 = vsel %vm1116, %v1479, %v1697
    %v1699 = vsel %vm1118, %v1486, %v1698
    %v1700 = vsel %vm1120, %v1493, %v1699
    %v1701 = vsel %vm1108, %v1507, %v1500
    %v1702 = vsel %vm1110, %v1514, %v1701
    %v1703 = vsel %vm1112, %v1521, %v1702
    %v1704 = vsel %vm1114, %v1528, %v1703
    %v1705 = vsel %vm1116, %v1535, %v1704
    %v1706 = vsel %vm1118, %v1542, %v1705
    %v1707 = vsel %vm1120, %v1549, %v1706
    %v1708 = vsel %vm1108, %v1563, %v1556
    %v1709 = vsel %vm1110, %v1570, %v1708
    %v1710 = vsel %vm1112, %v1577, %v1709
    %v1711 = vsel %vm1114, %v1584, %v1710
    %v1712 = vsel %vm1116, %v1591, %v1711
    %v1713 = vsel %vm1118, %v1598, %v1712
    %v1714 = vsel %vm1120, %v1605, %v1713
    %v1715 = vsel %vm1108, %v1619, %v1612
    %v1716 = vsel %vm1110, %v1626, %v1715
    %v1717 = vsel %vm1112, %v1633, %v1716
    %v1718 = vsel %vm1114, %v1640, %v1717
    %v1719 = vsel %vm1116, %v1647, %v1718
    %v1720 = vsel %vm1118, %v1654, %v1719
    %v1721 = vsel %vm1120, %v1661, %v1720
    %1726 = vst.msk [vmem:[#allocation4 + $0x8] sm:$0xff] %vm81, %v1700
    %1727 = vst.msk [vmem:[#allocation4 + $0x10] sm:$0xff] %vm81, %v1707
    %1728 = vst.msk [vmem:[#allocation4 + $0x28] sm:$0xff] %vm81, %v1714
    %1729 = vst.msk [vmem:[#allocation4 + $0x30] sm:$0xff] %vm81, %v1721
    %v1730 = vld [vmem:[#allocation4 + $0x7] sm:$0xff]
    %v1731 = vld [vmem:[#allocation4 + $0xf] sm:$0xff]
    %v1732 = vld [vmem:[#allocation4 + $0x27] sm:$0xff]
    %v1733 = vld [vmem:[#allocation4 + $0x2f] sm:$0xff]
    %v1734 = vld [vmem:[#allocation4 + $0x8] sm:$0xff]
    %v1735 = vld [vmem:[#allocation4 + $0x10] sm:$0xff]
    %v1736 = vld [vmem:[#allocation4 + $0x28] sm:$0xff]
    %v1737 = vld [vmem:[#allocation4 + $0x30] sm:$0xff]
    %v1738 = vld [vmem:[#allocation4 + $0x9] sm:$0xff]
    %v1739 = vld [vmem:[#allocation4 + $0x11] sm:$0xff]
    %v1740 = vld [vmem:[#allocation4 + $0x29] sm:$0xff]
    %v1741 = vld [vmem:[#allocation4 + $0x31] sm:$0xff]
    %1746 = vrot.lane.b32.xlu0 %v1734, 64
    %v1747 = vpop.permute.xlu0 %1746
    %1748 = vrot.lane.b32.xlu0 %v1735, 64
    %v1749 = vpop.permute.xlu0 %1748
    %1750 = vrot.lane.b32.xlu0 %v1736, 64
    %v1751 = vpop.permute.xlu0 %1750
    %1752 = vrot.lane.b32.xlu0 %v1737, 64
    %v1753 = vpop.permute.xlu0 %1752
    %v1758 = vsel %vm81, %v1730, %v1747
    %v1759 = vsel %vm81, %v1731, %v1749
    %v1760 = vsel %vm81, %v1732, %v1751
    %v1761 = vsel %vm81, %v1733, %v1753
    %v1762 = vld [vmem:[#allocation6] sm:$0xff]
    %v1763 = vld [vmem:[#allocation6 + $0x8] sm:$0xff]
    %v1764 = vld [vmem:[#allocation6 + $0x10] sm:$0xff]
    %v1765 = vld [vmem:[#allocation6 + $0x18] sm:$0xff]
    %v1766 = vld [vmem:[#allocation6 + $0x20] sm:$0xff]
    %v1767 = vld [vmem:[#allocation6 + $0x28] sm:$0xff]
    %v1768 = vld [vmem:[#allocation6 + $0x30] sm:$0xff]
    %v1769 = vld [vmem:[#allocation6 + $0x38] sm:$0xff]
    %v1770 = vld [vmem:[#allocation6 + $0x40] sm:$0xff]
    %v1771 = vld [vmem:[#allocation6 + $0x48] sm:$0xff]
    %v1772 = vld [vmem:[#allocation6 + $0x50] sm:$0xff]
    %v1773 = vld [vmem:[#allocation6 + $0x58] sm:$0xff]
    %v1774 = vld [vmem:[#allocation6 + $0x60] sm:$0xff]
    %v1775 = vld [vmem:[#allocation6 + $0x68] sm:$0xff]
    %v1776 = vld [vmem:[#allocation6 + $0x70] sm:$0xff]
    %v1777 = vld [vmem:[#allocation6 + $0x78] sm:$0xff]
    %v1778 = vld [vmem:[#allocation6 + $0x80] sm:$0xff]
    %v1779 = vld [vmem:[#allocation6 + $0x88] sm:$0xff]
    %v1780 = vld [vmem:[#allocation6 + $0x90] sm:$0xff]
    %v1781 = vld [vmem:[#allocation6 + $0x98] sm:$0xff]
    %v1782 = vld [vmem:[#allocation6 + $0xa0] sm:$0xff]
    %v1783 = vld [vmem:[#allocation6 + $0xa8] sm:$0xff]
    %v1784 = vld [vmem:[#allocation6 + $0xb0] sm:$0xff]
    %v1785 = vld [vmem:[#allocation6 + $0xb8] sm:$0xff]
    %v1786 = vld [vmem:[%s6] sm:$0x1]
    %v1788 = vperm.slane %v1786, 0
    %v1791 = vsel %vm81, %v1738, 0
    %v1794 = vsel %vm81, %v1739, 0
    %v1797 = vsel %vm81, %v1740, 0
    %v1800 = vsel %vm81, %v1741, 0
    %1802 = vmatpush.msra.mxu0 %v1777
    %1803 = vmatpush.msra.mxu0 %v1776
    %1804 = vmatpush.msra.mxu0 %v1775
    %1805 = vmatpush.msra.mxu0 %v1774
    %1806 = vmatpush.msra.mxu0 %v1773
    %1807 = vmatpush.msra.mxu0 %v1772
    %1808 = vmatpush.msra.mxu0 %v1771
    %1809 = vmatpush.msra.mxu0 %v1770
    %1810 = vmatpush.msra.mxu0 %v1769
    %1811 = vmatpush.msra.mxu0 %v1768
    %1812 = vmatpush.msra.mxu0 %v1767
    %1813 = vmatpush.msra.mxu0 %v1766
    %1814 = vmatpush.msra.mxu0 %v1765
    %1815 = vmatpush.msra.mxu0 %v1764
    %1816 = vmatpush.msra.mxu0 %v1763
    %1817 = vmatpush.msra.mxu0 %v1762
    %1818 = vmatmul.f32.gmra.mxu0 %v1758
    %v1819 = vpop.f32.mrf.mxu0
    %v1820 = vadd.f32 %v1788, %v1819
    %1821 = vmatmul.f32.gmra.mxu0 %v1759
    %v1822 = vpop.f32.mrf.mxu0
    %v1823 = vadd.f32 %v1788, %v1822
    %1824 = vmatmul.f32.gmra.mxu0 %v1760
    %v1825 = vpop.f32.mrf.mxu0
    %v1826 = vadd.f32 %v1788, %v1825
    %1827 = vmatmul.f32.gmra.mxu0 %v1761
    %v1828 = vpop.f32.mrf.mxu0
    %v1829 = vadd.f32 %v1788, %v1828
    %1830 = vdwg.mxu0
    %1831 = vmatpush.msra.mxu0 0.0
    %1832 = vmatpush.msra.mxu0 0.0
    %1833 = vmatpush.msra.mxu0 0.0
    %1834 = vmatpush.msra.mxu0 0.0
    %1835 = vmatpush.msra.mxu0 0.0
    %1836 = vmatpush.msra.mxu0 0.0
    %1837 = vmatpush.msra.mxu0 0.0
    %1838 = vmatpush.msra.mxu0 0.0
    %1839 = vmatpush.msra.mxu0 %v1785
    %1840 = vmatpush.msra.mxu0 %v1784
    %1841 = vmatpush.msra.mxu0 %v1783
    %1842 = vmatpush.msra.mxu0 %v1782
    %1843 = vmatpush.msra.mxu0 %v1781
    %1844 = vmatpush.msra.mxu0 %v1780
    %1845 = vmatpush.msra.mxu0 %v1779
    %1846 = vmatpush.msra.mxu0 %v1778
    %1847 = vmatmul.f32.gmra.mxu0 %v1791
    %v1848 = vpop.f32.mrf.mxu0
    %v1849 = vadd.f32 %v1820, %v1848
    %1850 = vmatmul.f32.gmra.mxu0 %v1794
    %v1851 = vpop.f32.mrf.mxu0
    %v1852 = vadd.f32 %v1823, %v1851
    %1853 = vmatmul.f32.gmra.mxu0 %v1797
    %v1854 = vpop.f32.mrf.mxu0
    %v1855 = vadd.f32 %v1826, %v1854
    %1856 = vmatmul.f32.gmra.mxu0 %v1800
    %v1857 = vpop.f32.mrf.mxu0
    %v1858 = vadd.f32 %v1829, %v1857
    %1859 = vdwg.mxu0
    %v1860 = vmax.f32 %v1849, 0.0
    %v1861 = vmax.f32 %v1852, 0.0
    %v1862 = vmax.f32 %v1855, 0.0
    %v1863 = vmax.f32 %v1858, 0.0
    %v1868 = vrot.slane %v1860, 2
    %v1869 = vrot.slane %v1860, 4
    %v1870 = vrot.slane %v1860, 6
    %v1871 = vrot.slane %v1861, 2
    %v1872 = vrot.slane %v1861, 4
    %v1873 = vrot.slane %v1861, 6
    %v1874 = vrot.slane %v1862, 2
    %v1875 = vrot.slane %v1862, 4
    %v1876 = vrot.slane %v1862, 6
    %v1877 = vrot.slane %v1863, 2
    %v1878 = vrot.slane %v1863, 4
    %v1879 = vrot.slane %v1863, 6
    %vm1892 = vcmask 1041408
    %v1893 = vsel %vm1892, %v1860, -inf
    %v1894 = vrot.slane %v1893, 4
    %v1895 = vmax.f32 %v1893, %v1894
    %v1896 = vrot.slane %v1895, 2
    %v1897 = vmax.f32 %v1895, %v1896
    %v1898 = vrot.slane %v1897, 1
    %v1899 = vmax.f32 %v1897, %v1898
    %v1900 = vsel %vm1892, %v1868, -inf
    %v1901 = vrot.slane %v1900, 4
    %v1902 = vmax.f32 %v1900, %v1901
    %v1903 = vrot.slane %v1902, 2
    %v1904 = vmax.f32 %v1902, %v1903
    %v1905 = vrot.slane %v1904, 1
    %v1906 = vmax.f32 %v1904, %v1905
    %v1907 = vsel %vm1892, %v1869, -inf
    %v1908 = vrot.slane %v1907, 4
    %v1909 = vmax.f32 %v1907, %v1908
    %v1910 = vrot.slane %v1909, 2
    %v1911 = vmax.f32 %v1909, %v1910
    %v1912 = vrot.slane %v1911, 1
    %v1913 = vmax.f32 %v1911, %v1912
    %v1914 = vsel %vm1892, %v1870, -inf
    %v1915 = vrot.slane %v1914, 4
    %v1916 = vmax.f32 %v1914, %v1915
    %v1917 = vrot.slane %v1916, 2
    %v1918 = vmax.f32 %v1916, %v1917
    %v1919 = vrot.slane %v1918, 1
    %v1920 = vmax.f32 %v1918, %v1919
    %v1921 = vsel %vm1892, %v1861, -inf
    %v1922 = vrot.slane %v1921, 4
    %v1923 = vmax.f32 %v1921, %v1922
    %v1924 = vrot.slane %v1923, 2
    %v1925 = vmax.f32 %v1923, %v1924
    %v1926 = vrot.slane %v1925, 1
    %v1927 = vmax.f32 %v1925, %v1926
    %v1928 = vsel %vm1892, %v1871, -inf
    %v1929 = vrot.slane %v1928, 4
    %v1930 = vmax.f32 %v1928, %v1929
    %v1931 = vrot.slane %v1930, 2
    %v1932 = vmax.f32 %v1930, %v1931
    %v1933 = vrot.slane %v1932, 1
    %v1934 = vmax.f32 %v1932, %v1933
    %v1935 = vsel %vm1892, %v1872, -inf
    %v1936 = vrot.slane %v1935, 4
    %v1937 = vmax.f32 %v1935, %v1936
    %v1938 = vrot.slane %v1937, 2
    %v1939 = vmax.f32 %v1937, %v1938
    %v1940 = vrot.slane %v1939, 1
    %v1941 = vmax.f32 %v1939, %v1940
    %v1942 = vsel %vm1892, %v1873, -inf
    %v1943 = vrot.slane %v1942, 4
    %v1944 = vmax.f32 %v1942, %v1943
    %v1945 = vrot.slane %v1944, 2
    %v1946 = vmax.f32 %v1944, %v1945
    %v1947 = vrot.slane %v1946, 1
    %v1948 = vmax.f32 %v1946, %v1947
    %v1949 = vsel %vm1892, %v1862, -inf
    %v1950 = vrot.slane %v1949, 4
    %v1951 = vmax.f32 %v1949, %v1950
    %v1952 = vrot.slane %v1951, 2
    %v1953 = vmax.f32 %v1951, %v1952
    %v1954 = vrot.slane %v1953, 1
    %v1955 = vmax.f32 %v1953, %v1954
    %v1956 = vsel %vm1892, %v1874, -inf
    %v1957 = vrot.slane %v1956, 4
    %v1958 = vmax.f32 %v1956, %v1957
    %v1959 = vrot.slane %v1958, 2
    %v1960 = vmax.f32 %v1958, %v1959
    %v1961 = vrot.slane %v1960, 1
    %v1962 = vmax.f32 %v1960, %v1961
    %v1963 = vsel %vm1892, %v1875, -inf
    %v1964 = vrot.slane %v1963, 4
    %v1965 = vmax.f32 %v1963, %v1964
    %v1966 = vrot.slane %v1965, 2
    %v1967 = vmax.f32 %v1965, %v1966
    %v1968 = vrot.slane %v1967, 1
    %v1969 = vmax.f32 %v1967, %v1968
    %v1970 = vsel %vm1892, %v1876, -inf
    %v1971 = vrot.slane %v1970, 4
    %v1972 = vmax.f32 %v1970, %v1971
    %v1973 = vrot.slane %v1972, 2
    %v1974 = vmax.f32 %v1972, %v1973
    %v1975 = vrot.slane %v1974, 1
    %v1976 = vmax.f32 %v1974, %v1975
    %v1977 = vsel %vm1892, %v1863, -inf
    %v1978 = vrot.slane %v1977, 4
    %v1979 = vmax.f32 %v1977, %v1978
    %v1980 = vrot.slane %v1979, 2
    %v1981 = vmax.f32 %v1979, %v1980
    %v1982 = vrot.slane %v1981, 1
    %v1983 = vmax.f32 %v1981, %v1982
    %v1984 = vsel %vm1892, %v1877, -inf
    %v1985 = vrot.slane %v1984, 4
    %v1986 = vmax.f32 %v1984, %v1985
    %v1987 = vrot.slane %v1986, 2
    %v1988 = vmax.f32 %v1986, %v1987
    %v1989 = vrot.slane %v1988, 1
    %v1990 = vmax.f32 %v1988, %v1989
    %v1991 = vsel %vm1892, %v1878, -inf
    %v1992 = vrot.slane %v1991, 4
    %v1993 = vmax.f32 %v1991, %v1992
    %v1994 = vrot.slane %v1993, 2
    %v1995 = vmax.f32 %v1993, %v1994
    %v1996 = vrot.slane %v1995, 1
    %v1997 = vmax.f32 %v1995, %v1996
    %v1998 = vsel %vm1892, %v1879, -inf
    %v1999 = vrot.slane %v1998, 4
    %v2000 = vmax.f32 %v1998, %v1999
    %v2001 = vrot.slane %v2000, 2
    %v2002 = vmax.f32 %v2000, %v2001
    %v2003 = vrot.slane %v2002, 1
    %v2004 = vmax.f32 %v2002, %v2003
    %v2021 = vsel %vm1108, %v1906, %v1899
    %v2022 = vsel %vm1110, %v1913, %v2021
    %v2023 = vsel %vm1112, %v1920, %v2022
    %v2024 = vsel %vm1114, %v1927, %v2023
    %v2025 = vsel %vm1116, %v1934, %v2024
    %v2026 = vsel %vm1118, %v1941, %v2025
    %v2027 = vsel %vm1120, %v1948, %v2026
    %v2028 = vsel %vm1108, %v1962, %v1955
    %v2029 = vsel %vm1110, %v1969, %v2028
    %v2030 = vsel %vm1112, %v1976, %v2029
    %v2031 = vsel %vm1114, %v1983, %v2030
    %v2032 = vsel %vm1116, %v1990, %v2031
    %v2033 = vsel %vm1118, %v1997, %v2032
    %v2034 = vsel %vm1120, %v2004, %v2033
    %v2037 = vrot.slane %v2027, 4
    %vm2038 = vcmask 1047556
    %v2039 = vsel %vm2038, 0.0, %v2037
    %v2041 = vunpack.c.l.s4 1983009808
    %v2042 = vunpack.c.0.s8 %v2041
    %v2043 = vperm.slane %v2027, %v2042
    %v2045 = vunpack.c.l.s4 1983009808
    %v2046 = vunpack.c.0.s8 %v2045
    %v2047 = vperm.slane %v2039, %v2046
    %v2048 = vrot.slane %v2034, 4
    %v2049 = vsel %vm2038, 0.0, %v2048
    %v2051 = vunpack.c.l.s4 1983009808
    %v2052 = vunpack.c.0.s8 %v2051
    %v2053 = vperm.slane %v2034, %v2052
    %v2055 = vunpack.c.l.s4 1983009808
    %v2056 = vunpack.c.0.s8 %v2055
    %v2057 = vperm.slane %v2049, %v2056
    %v2058 = vrot.slane %v2053, 4
    %v2059 = vsel %vm2038, %v2058, %v2043
    %v2060 = vrot.slane %v2043, 4
    %v2061 = vsel %vm2038, %v2053, %v2060
    %v2063 = vunpack.c.l.s4 1934713408
    %v2064 = vunpack.c.0.s8 %v2063
    %v2065 = vperm.slane %v2059, %v2064
    %v2067 = vunpack.c.l.s4 1934713408
    %v2068 = vunpack.c.0.s8 %v2067
    %v2069 = vperm.slane %v2061, %v2068
    %v2070 = vrot.slane %v2057, 4
    %v2071 = vsel %vm2038, %v2070, %v2047
    %v2072 = vrot.slane %v2047, 4
    %v2073 = vsel %vm2038, %v2057, %v2072
    %v2075 = vunpack.c.l.s4 1934713408
    %v2076 = vunpack.c.0.s8 %v2075
    %v2077 = vperm.slane %v2071, %v2076
    %v2079 = vunpack.c.l.s4 1934713408
    %v2080 = vunpack.c.0.s8 %v2079
    %v2081 = vperm.slane %v2073, %v2080
    %v2082 = vrot.slane %v2065, 4
    %v2083 = vsel %vm2038, 0.0, %v2082
    %v2084 = vrot.slane %v2069, 4
    %v2085 = vsel %vm2038, 0.0, %v2084
    %v2086 = vrot.slane %v2077, 4
    %v2087 = vsel %vm2038, 0.0, %v2086
    %v2088 = vrot.slane %v2081, 4
    %v2089 = vsel %vm2038, 0.0, %v2088
    %v2090 = vld [vmem:[#allocation8] sm:$0xff]
    %v2091 = vld [vmem:[#allocation8 + $0x8] sm:$0xff]
    %v2092 = vld [vmem:[#allocation8 + $0x10] sm:$0xff]
    %v2093 = vld [vmem:[#allocation8 + $0x18] sm:$0xff]
    %v2094 = vld [vmem:[#allocation8 + $0x20] sm:$0xff]
    %v2095 = vld [vmem:[#allocation8 + $0x28] sm:$0xff]
    %v2096 = vld [vmem:[#allocation8 + $0x30] sm:$0xff]
    %v2097 = vld [vmem:[#allocation8 + $0x38] sm:$0xff]
    %v2098 = vld [vmem:[#allocation8 + $0x40] sm:$0xff]
    %v2099 = vld [vmem:[#allocation8 + $0x48] sm:$0xff]
    %v2100 = vld [vmem:[#allocation8 + $0x50] sm:$0xff]
    %v2101 = vld [vmem:[#allocation8 + $0x58] sm:$0xff]
    %v2102 = vld [vmem:[#allocation8 + $0x60] sm:$0xff]
    %v2103 = vld [vmem:[#allocation8 + $0x68] sm:$0xff]
    %v2104 = vld [vmem:[#allocation8 + $0x70] sm:$0xff]
    %v2105 = vld [vmem:[#allocation8 + $0x78] sm:$0xff]
    %v2106 = vld [vmem:[#allocation8 + $0x80] sm:$0xff]
    %v2107 = vld [vmem:[#allocation8 + $0x88] sm:$0xff]
    %v2108 = vld [vmem:[#allocation8 + $0x90] sm:$0xff]
    %v2109 = vld [vmem:[#allocation8 + $0x98] sm:$0xff]
    %v2110 = vld [vmem:[#allocation8 + $0xa0] sm:$0xff]
    %v2111 = vld [vmem:[#allocation8 + $0xa8] sm:$0xff]
    %v2112 = vld [vmem:[#allocation8 + $0xb0] sm:$0xff]
    %v2113 = vld [vmem:[#allocation8 + $0xb8] sm:$0xff]
    %v2114 = vld [vmem:[#allocation8 + $0xc0] sm:$0xff]
    %v2115 = vld [vmem:[#allocation8 + $0xc8] sm:$0xff]
    %v2116 = vld [vmem:[#allocation8 + $0xd0] sm:$0xff]
    %v2117 = vld [vmem:[#allocation8 + $0xd8] sm:$0xff]
    %v2118 = vld [vmem:[#allocation8 + $0xe0] sm:$0xff]
    %v2119 = vld [vmem:[#allocation8 + $0xe8] sm:$0xff]
    %v2120 = vld [vmem:[#allocation8 + $0xf0] sm:$0xff]
    %v2121 = vld [vmem:[#allocation8 + $0xf8] sm:$0xff]
    %v2122 = vld [vmem:[#allocation8 + $0x100] sm:$0xff]
    %v2123 = vld [vmem:[#allocation8 + $0x108] sm:$0xff]
    %v2124 = vld [vmem:[#allocation8 + $0x110] sm:$0xff]
    %v2125 = vld [vmem:[#allocation8 + $0x118] sm:$0xff]
    %v2126 = vld [vmem:[#allocation8 + $0x120] sm:$0xff]
    %v2127 = vld [vmem:[#allocation8 + $0x128] sm:$0xff]
    %v2128 = vld [vmem:[#allocation8 + $0x130] sm:$0xff]
    %v2129 = vld [vmem:[#allocation8 + $0x138] sm:$0xff]
    %v2130 = vld [vmem:[#allocation8 + $0x140] sm:$0xff]
    %v2131 = vld [vmem:[#allocation8 + $0x148] sm:$0xff]
    %v2132 = vld [vmem:[#allocation8 + $0x150] sm:$0xff]
    %v2133 = vld [vmem:[#allocation8 + $0x158] sm:$0xff]
    %v2134 = vld [vmem:[#allocation8 + $0x160] sm:$0xff]
    %v2135 = vld [vmem:[#allocation8 + $0x168] sm:$0xff]
    %v2136 = vld [vmem:[#allocation8 + $0x170] sm:$0xff]
    %v2137 = vld [vmem:[#allocation8 + $0x178] sm:$0xff]
    %v2138 = vld [vmem:[#allocation8 + $0x180] sm:$0xff]
    %v2139 = vld [vmem:[#allocation8 + $0x188] sm:$0xff]
    %v2140 = vld [vmem:[#allocation8 + $0x190] sm:$0xff]
    %v2141 = vld [vmem:[#allocation8 + $0x198] sm:$0xff]
    %v2142 = vld [vmem:[#allocation8 + $0x1a0] sm:$0xff]
    %v2143 = vld [vmem:[#allocation8 + $0x1a8] sm:$0xff]
    %v2144 = vld [vmem:[#allocation8 + $0x1b0] sm:$0xff]
    %v2145 = vld [vmem:[#allocation8 + $0x1b8] sm:$0xff]
    %v2146 = vld [vmem:[#allocation8 + $0x1c0] sm:$0xff]
    %v2147 = vld [vmem:[#allocation8 + $0x1c8] sm:$0xff]
    %v2148 = vld [vmem:[#allocation8 + $0x1d0] sm:$0xff]
    %v2149 = vld [vmem:[#allocation8 + $0x1d8] sm:$0xff]
    %v2150 = vld [vmem:[#allocation8 + $0x1e0] sm:$0xff]
    %v2151 = vld [vmem:[#allocation8 + $0x1e8] sm:$0xff]
    %v2152 = vld [vmem:[#allocation8 + $0x1f0] sm:$0xff]
    %v2153 = vld [vmem:[#allocation8 + $0x1f8] sm:$0xff]
    %v2154 = vld [vmem:[#allocation8 + $0x200] sm:$0xff]
    %v2155 = vld [vmem:[#allocation8 + $0x208] sm:$0xff]
    %v2156 = vld [vmem:[#allocation8 + $0x210] sm:$0xff]
    %v2157 = vld [vmem:[#allocation8 + $0x218] sm:$0xff]
    %v2158 = vld [vmem:[#allocation8 + $0x220] sm:$0xff]
    %v2159 = vld [vmem:[#allocation8 + $0x228] sm:$0xff]
    %v2160 = vld [vmem:[#allocation8 + $0x230] sm:$0xff]
    %v2161 = vld [vmem:[#allocation8 + $0x238] sm:$0xff]
    %v2162 = vld [vmem:[#allocation8 + $0x240] sm:$0xff]
    %v2163 = vld [vmem:[#allocation8 + $0x248] sm:$0xff]
    %v2164 = vld [vmem:[#allocation8 + $0x250] sm:$0xff]
    %v2165 = vld [vmem:[#allocation8 + $0x258] sm:$0xff]
    %v2166 = vld [vmem:[#allocation8 + $0x260] sm:$0xff]
    %v2167 = vld [vmem:[#allocation8 + $0x268] sm:$0xff]
    %v2168 = vld [vmem:[#allocation8 + $0x270] sm:$0xff]
    %v2169 = vld [vmem:[#allocation8 + $0x278] sm:$0xff]
    %v2170 = vld [vmem:[#allocation8 + $0x280] sm:$0xff]
    %v2171 = vld [vmem:[#allocation8 + $0x288] sm:$0xff]
    %v2172 = vld [vmem:[#allocation8 + $0x290] sm:$0xff]
    %v2173 = vld [vmem:[#allocation8 + $0x298] sm:$0xff]
    %v2174 = vld [vmem:[#allocation8 + $0x2a0] sm:$0xff]
    %v2175 = vld [vmem:[#allocation8 + $0x2a8] sm:$0xff]
    %v2176 = vld [vmem:[#allocation8 + $0x2b0] sm:$0xff]
    %v2177 = vld [vmem:[#allocation8 + $0x2b8] sm:$0xff]
    %v2178 = vld [vmem:[#allocation8 + $0x2c0] sm:$0xff]
    %v2179 = vld [vmem:[#allocation8 + $0x2c8] sm:$0xff]
    %v2180 = vld [vmem:[#allocation8 + $0x2d0] sm:$0xff]
    %v2181 = vld [vmem:[#allocation8 + $0x2d8] sm:$0xff]
    %v2182 = vld [vmem:[#allocation8 + $0x2e0] sm:$0xff]
    %v2183 = vld [vmem:[#allocation8 + $0x2e8] sm:$0xff]
    %v2184 = vld [vmem:[#allocation8 + $0x2f0] sm:$0xff]
    %v2185 = vld [vmem:[#allocation8 + $0x2f8] sm:$0xff]
    %v2186 = vld [vmem:[#allocation8 + $0x300] sm:$0xff]
    %v2187 = vld [vmem:[#allocation8 + $0x308] sm:$0xff]
    %v2188 = vld [vmem:[#allocation8 + $0x310] sm:$0xff]
    %v2189 = vld [vmem:[#allocation8 + $0x318] sm:$0xff]
    %v2190 = vld [vmem:[#allocation8 + $0x320] sm:$0xff]
    %v2191 = vld [vmem:[#allocation8 + $0x328] sm:$0xff]
    %v2192 = vld [vmem:[#allocation8 + $0x330] sm:$0xff]
    %v2193 = vld [vmem:[#allocation8 + $0x338] sm:$0xff]
    %v2194 = vld [vmem:[#allocation8 + $0x340] sm:$0xff]
    %v2195 = vld [vmem:[#allocation8 + $0x348] sm:$0xff]
    %v2196 = vld [vmem:[#allocation8 + $0x350] sm:$0xff]
    %v2197 = vld [vmem:[#allocation8 + $0x358] sm:$0xff]
    %v2198 = vld [vmem:[#allocation8 + $0x360] sm:$0xff]
    %v2199 = vld [vmem:[#allocation8 + $0x368] sm:$0xff]
    %v2200 = vld [vmem:[#allocation8 + $0x370] sm:$0xff]
    %v2201 = vld [vmem:[#allocation8 + $0x378] sm:$0xff]
    %v2202 = vld [vmem:[#allocation8 + $0x380] sm:$0xff]
    %v2203 = vld [vmem:[#allocation8 + $0x388] sm:$0xff]
    %v2204 = vld [vmem:[#allocation8 + $0x390] sm:$0xff]
    %v2205 = vld [vmem:[#allocation8 + $0x398] sm:$0xff]
    %v2206 = vld [vmem:[#allocation8 + $0x3a0] sm:$0xff]
    %v2207 = vld [vmem:[#allocation8 + $0x3a8] sm:$0xff]
    %v2208 = vld [vmem:[#allocation8 + $0x3b0] sm:$0xff]
    %v2209 = vld [vmem:[#allocation8 + $0x3b8] sm:$0xff]
    %v2210 = vld [vmem:[#allocation8 + $0x3c0] sm:$0xff]
    %v2211 = vld [vmem:[#allocation8 + $0x3c8] sm:$0xff]
    %v2212 = vld [vmem:[#allocation8 + $0x3d0] sm:$0xff]
    %v2213 = vld [vmem:[#allocation8 + $0x3d8] sm:$0xff]
    %v2214 = vld [vmem:[#allocation8 + $0x3e0] sm:$0xff]
    %v2215 = vld [vmem:[#allocation8 + $0x3e8] sm:$0xff]
    %v2216 = vld [vmem:[#allocation8 + $0x3f0] sm:$0xff]
    %v2217 = vld [vmem:[#allocation8 + $0x3f8] sm:$0xff]
    %v2218 = vld [vmem:[%s8] sm:$0x1]
    %v2220 = vperm.slane %v2218, 0
    %2222 = vmatpush.msra.mxu0 %v2105
    %2223 = vmatpush.msra.mxu0 %v2104
    %2224 = vmatpush.msra.mxu0 %v2103
    %2225 = vmatpush.msra.mxu0 %v2102
    %2226 = vmatpush.msra.mxu0 %v2101
    %2227 = vmatpush.msra.mxu0 %v2100
    %2228 = vmatpush.msra.mxu0 %v2099
    %2229 = vmatpush.msra.mxu0 %v2098
    %2230 = vmatpush.msra.mxu0 %v2097
    %2231 = vmatpush.msra.mxu0 %v2096
    %2232 = vmatpush.msra.mxu0 %v2095
    %2233 = vmatpush.msra.mxu0 %v2094
    %2234 = vmatpush.msra.mxu0 %v2093
    %2235 = vmatpush.msra.mxu0 %v2092
    %2236 = vmatpush.msra.mxu0 %v2091
    %2237 = vmatpush.msra.mxu0 %v2090
    %2238 = vmatmul.f32.gmra.mxu0 %v2065
    %v2239 = vpop.f32.mrf.mxu0
    %v2240 = vadd.f32 %v2220, %v2239
    %2241 = vdwg.mxu0
    %2242 = vmatpush.msra.mxu0 %v2121
    %2243 = vmatpush.msra.mxu0 %v2120
    %2244 = vmatpush.msra.mxu0 %v2119
    %2245 = vmatpush.msra.mxu0 %v2118
    %2246 = vmatpush.msra.mxu0 %v2117
    %2247 = vmatpush.msra.mxu0 %v2116
    %2248 = vmatpush.msra.mxu0 %v2115
    %2249 = vmatpush.msra.mxu0 %v2114
    %2250 = vmatpush.msra.mxu0 %v2113
    %2251 = vmatpush.msra.mxu0 %v2112
    %2252 = vmatpush.msra.mxu0 %v2111
    %2253 = vmatpush.msra.mxu0 %v2110
    %2254 = vmatpush.msra.mxu0 %v2109
    %2255 = vmatpush.msra.mxu0 %v2108
    %2256 = vmatpush.msra.mxu0 %v2107
    %2257 = vmatpush.msra.mxu0 %v2106
    %2258 = vmatmul.f32.gmra.mxu0 %v2083
    %v2259 = vpop.f32.mrf.mxu0
    %v2260 = vadd.f32 %v2240, %v2259
    %2261 = vdwg.mxu0
    %2262 = vmatpush.msra.mxu0 %v2137
    %2263 = vmatpush.msra.mxu0 %v2136
    %2264 = vmatpush.msra.mxu0 %v2135
    %2265 = vmatpush.msra.mxu0 %v2134
    %2266 = vmatpush.msra.mxu0 %v2133
    %2267 = vmatpush.msra.mxu0 %v2132
    %2268 = vmatpush.msra.mxu0 %v2131
    %2269 = vmatpush.msra.mxu0 %v2130
    %2270 = vmatpush.msra.mxu0 %v2129
    %2271 = vmatpush.msra.mxu0 %v2128
    %2272 = vmatpush.msra.mxu0 %v2127
    %2273 = vmatpush.msra.mxu0 %v2126
    %2274 = vmatpush.msra.mxu0 %v2125
    %2275 = vmatpush.msra.mxu0 %v2124
    %2276 = vmatpush.msra.mxu0 %v2123
    %2277 = vmatpush.msra.mxu0 %v2122
    %2278 = vmatmul.f32.gmra.mxu0 %v2069
    %v2279 = vpop.f32.mrf.mxu0
    %v2280 = vadd.f32 %v2260, %v2279
    %2281 = vdwg.mxu0
    %2282 = vmatpush.msra.mxu0 %v2153
    %2283 = vmatpush.msra.mxu0 %v2152
    %2284 = vmatpush.msra.mxu0 %v2151
    %2285 = vmatpush.msra.mxu0 %v2150
    %2286 = vmatpush.msra.mxu0 %v2149
    %2287 = vmatpush.msra.mxu0 %v2148
    %2288 = vmatpush.msra.mxu0 %v2147
    %2289 = vmatpush.msra.mxu0 %v2146
    %2290 = vmatpush.msra.mxu0 %v2145
    %2291 = vmatpush.msra.mxu0 %v2144
    %2292 = vmatpush.msra.mxu0 %v2143
    %2293 = vmatpush.msra.mxu0 %v2142
    %2294 = vmatpush.msra.mxu0 %v2141
    %2295 = vmatpush.msra.mxu0 %v2140
    %2296 = vmatpush.msra.mxu0 %v2139
    %2297 = vmatpush.msra.mxu0 %v2138
    %2298 = vmatmul.f32.gmra.mxu0 %v2085
    %v2299 = vpop.f32.mrf.mxu0
    %v2300 = vadd.f32 %v2280, %v2299
    %2301 = vdwg.mxu0
    %2302 = vmatpush.msra.mxu0 %v2169
    %2303 = vmatpush.msra.mxu0 %v2168
    %2304 = vmatpush.msra.mxu0 %v2167
    %2305 = vmatpush.msra.mxu0 %v2166
    %2306 = vmatpush.msra.mxu0 %v2165
    %2307 = vmatpush.msra.mxu0 %v2164
    %2308 = vmatpush.msra.mxu0 %v2163
    %2309 = vmatpush.msra.mxu0 %v2162
    %2310 = vmatpush.msra.mxu0 %v2161
    %2311 = vmatpush.msra.mxu0 %v2160
    %2312 = vmatpush.msra.mxu0 %v2159
    %2313 = vmatpush.msra.mxu0 %v2158
    %2314 = vmatpush.msra.mxu0 %v2157
    %2315 = vmatpush.msra.mxu0 %v2156
    %2316 = vmatpush.msra.mxu0 %v2155
    %2317 = vmatpush.msra.mxu0 %v2154
    %2318 = vmatmul.f32.gmra.mxu0 %v2077
    %v2319 = vpop.f32.mrf.mxu0
    %v2320 = vadd.f32 %v2300, %v2319
    %2321 = vdwg.mxu0
    %2322 = vmatpush.msra.mxu0 %v2185
    %2323 = vmatpush.msra.mxu0 %v2184
    %2324 = vmatpush.msra.mxu0 %v2183
    %2325 = vmatpush.msra.mxu0 %v2182
    %2326 = vmatpush.msra.mxu0 %v2181
    %2327 = vmatpush.msra.mxu0 %v2180
    %2328 = vmatpush.msra.mxu0 %v2179
    %2329 = vmatpush.msra.mxu0 %v2178
    %2330 = vmatpush.msra.mxu0 %v2177
    %2331 = vmatpush.msra.mxu0 %v2176
    %2332 = vmatpush.msra.mxu0 %v2175
    %2333 = vmatpush.msra.mxu0 %v2174
    %2334 = vmatpush.msra.mxu0 %v2173
    %2335 = vmatpush.msra.mxu0 %v2172
    %2336 = vmatpush.msra.mxu0 %v2171
    %2337 = vmatpush.msra.mxu0 %v2170
    %2338 = vmatmul.f32.gmra.mxu0 %v2087
    %v2339 = vpop.f32.mrf.mxu0
    %v2340 = vadd.f32 %v2320, %v2339
    %2341 = vdwg.mxu0
    %2342 = vmatpush.msra.mxu0 %v2201
    %2343 = vmatpush.msra.mxu0 %v2200
    %2344 = vmatpush.msra.mxu0 %v2199
    %2345 = vmatpush.msra.mxu0 %v2198
    %2346 = vmatpush.msra.mxu0 %v2197
    %2347 = vmatpush.msra.mxu0 %v2196
    %2348 = vmatpush.msra.mxu0 %v2195
    %2349 = vmatpush.msra.mxu0 %v2194
    %2350 = vmatpush.msra.mxu0 %v2193
    %2351 = vmatpush.msra.mxu0 %v2192
    %2352 = vmatpush.msra.mxu0 %v2191
    %2353 = vmatpush.msra.mxu0 %v2190
    %2354 = vmatpush.msra.mxu0 %v2189
    %2355 = vmatpush.msra.mxu0 %v2188
    %2356 = vmatpush.msra.mxu0 %v2187
    %2357 = vmatpush.msra.mxu0 %v2186
    %2358 = vmatmul.f32.gmra.mxu0 %v2081
    %v2359 = vpop.f32.mrf.mxu0
    %v2360 = vadd.f32 %v2340, %v2359
    %2361 = vdwg.mxu0
    %2362 = vmatpush.msra.mxu0 %v2217
    %2363 = vmatpush.msra.mxu0 %v2216
    %2364 = vmatpush.msra.mxu0 %v2215
    %2365 = vmatpush.msra.mxu0 %v2214
    %2366 = vmatpush.msra.mxu0 %v2213
    %2367 = vmatpush.msra.mxu0 %v2212
    %2368 = vmatpush.msra.mxu0 %v2211
    %2369 = vmatpush.msra.mxu0 %v2210
    %2370 = vmatpush.msra.mxu0 %v2209
    %2371 = vmatpush.msra.mxu0 %v2208
    %2372 = vmatpush.msra.mxu0 %v2207
    %2373 = vmatpush.msra.mxu0 %v2206
    %2374 = vmatpush.msra.mxu0 %v2205
    %2375 = vmatpush.msra.mxu0 %v2204
    %2376 = vmatpush.msra.mxu0 %v2203
    %2377 = vmatpush.msra.mxu0 %v2202
    %2378 = vmatmul.f32.gmra.mxu0 %v2089
    %v2379 = vpop.f32.mrf.mxu0
    %v2380 = vadd.f32 %v2360, %v2379
    %2381 = vdwg.mxu0
    %v2382 = vmax.f32 %v2380, 0.0
    %v2383 = vld [vmem:[%s9] sm:$0x1]
    %v2385 = vperm.slane %v2383, 0
    %v2387 = vmul.f32 %v2382, %v2385
    %v2388 = vsel %vm1892, %v2387, 0.0
    %2389 = vadd.xlane.f32.xlu0 %v2388
    %v2390 = vpop.xlane.xlu0 %2389
    %v2391 = vld [vmem:[#allocation5] sm:$0x1]
    %v2393 = vperm.slane %v2391, 0
    %v2395 = vadd.f32 %v2390, %v2393
    %vm2396 = vcmask 1024
    %2397 = vst.msk [vmem:[%s11] sm:$0x3] %vm2396, %v2395
    // Predicated region
    $region54: #{spectral_cnn_forward.1} parent=1 // pred_check
      _
    $region55: #{spectral_cnn_forward.1} parent=1 // pred_check_branch
      %2399 = sbr.rel (0) target = $region57
    $region56: #{spectral_cnn_forward.1} parent=1 // pred_region
      _
    $region57: #{spectral_cnn_forward.1} parent=1 // pred_fallthru
      _
    // Predicated region
    $region58: #{spectral_cnn_forward.1} parent=1 // pred_check
      _
    $region59: #{spectral_cnn_forward.1} parent=1 // pred_check_branch
      %2401 = sbr.rel (0) target = $region61
    $region60: #{spectral_cnn_forward.1} parent=1 // pred_region
      _
    $region61: #{spectral_cnn_forward.1} parent=1 // pred_fallthru
      _
    %2402 = vsyncpa [#allocation7], 1
    %2403 = vsyncpa [#allocation9], 1

</llo_original>
